<compile_context>
chip_gen: v7x
topology: tpu7x:2x2x1
jax: 0.10.0
libtpu: 0.0.40
codegen_flags: <defaults>
</compile_context>

<pallas_src>
import functools

import jax
import jax.numpy as jnp
from jax.experimental import pallas as pl
from jax.experimental.pallas import tpu as pltpu

# ----------------------------- config (mini-BERT) -----------------------------
VOCAB = 100
HIDDEN = 128
HEADS = 2
HEAD_DIM = HIDDEN // HEADS
INTER = 4 * HIDDEN
LAYERS = 2
MAX_POS = 64
LN_EPS = 1e-12
N_CLASSES = 2
LANE = 128  # lane-tile width used for Q/K head padding and the classifier output

assert HEAD_DIM <= LANE and HIDDEN % LANE == 0


# ----------------------------- in-kernel helpers -------------------------------
def _layernorm(x, g, b, eps):
    mu = jnp.mean(x, axis=-1, keepdims=True)
    xc = x - mu
    var = jnp.mean(xc * xc, axis=-1, keepdims=True)
    return xc * jax.lax.rsqrt(var + eps) * g + b


def _gelu(x):
    # TODO(synk): PyTorch/HF BERT uses the exact erf-based GELU; tanh approximation
    # kept for guaranteed Mosaic lowering (small numerical difference).
    c = 0.7978845608028654  # sqrt(2/pi)
    return 0.5 * x * (1.0 + jnp.tanh(c * (x + 0.044715 * x * x * x)))


# ----------------------------- fused encoder + head kernel ---------------------
def _encoder_kernel(emb_ref, mask_ref, eg_ref, eb_ref,
                    wqkv_ref, bqkv_ref, bo_ref,
                    ln1g_ref, ln1b_ref, w1_ref, b1_ref, w2_ref, b2_ref,
                    ln2g_ref, ln2b_ref,
                    wp_ref, bp_ref, wf_ref, bf_ref,
                    logits_ref, x_ref,
                    *, B, S, heads, lane, eps):
    """One grid step == one transformer layer; the residual stream stays in the VMEM
    scratch x_ref across the whole stack.  The last step also runs the fused
    pooler + classifier head and writes the lane-dense logits output."""
    l = pl.program_id(0)

    @pl.when(l == 0)
    def _embedding_layernorm():
        x_ref[...] = _layernorm(emb_ref[...], eg_ref[...], eb_ref[...], eps)

    x = x_ref[...]                       # (M, H) f32, VMEM-resident across layers
    H = x.shape[-1]
    blk = 2 * lane + H                   # per-head width in the packed qkv: [q | k | vo]

    # Fused QKV projection: Q pre-scaled by 1/sqrt(dh), per-head Q/K zero-padded to a
    # full lane tile, per-head V already projected through Wo.  bf16 in / f32 acc.
    qkv = jnp.dot(x.astype(jnp.bfloat16), wqkv_ref[...],
                  preferred_element_type=jnp.float32) + bqkv_ref[...]
    qkv_b = qkv.astype(jnp.bfloat16)     # single cast, reused by all heads
    mask = mask_ref[...]                 # (M, M) additive block-diag + padding mask

    attn = None
    for h in range(heads):               # static unroll; all slices lane-tile aligned
        base = h * blk
        qh = qkv_b[:, base:base + lane]
        kh = qkv_b[:, base + lane:base + 2 * lane]
        vh = qkv_b[:, base + 2 * lane:base + 2 * lane + H]
        s = jax.lax.dot_general(qh, kh, (((1,), (1,)), ((), ())),
                                preferred_element_type=jnp.float32)   # (M, M)
        s = s + mask
        m = jnp.max(s, axis=-1, keepdims=True)
        p = jnp.exp(s - m)
        p = p * pl.reciprocal(jnp.sum(p, axis=-1, keepdims=True), approx=True)  # EUP
        ctx = jnp.dot(p.astype(jnp.bfloat16), vh,
                      preferred_element_type=jnp.float32)             # (M, H)
        attn = ctx if attn is None else attn + ctx
    attn = attn + bo_ref[...]            # bo' = bo + bv @ Wo (folded in pack_params)

    x1 = _layernorm(attn + x, ln1g_ref[...], ln1b_ref[...], eps)

    h1 = _gelu(jnp.dot(x1.astype(jnp.bfloat16), w1_ref[...],
                       preferred_element_type=jnp.float32) + b1_ref[...])
    h2 = jnp.dot(h1.astype(jnp.bfloat16), w2_ref[...],
                 preferred_element_type=jnp.float32) + b2_ref[...]
    x_new = _layernorm(h2 + x1, ln2g_ref[...], ln2b_ref[...], eps)
    x_ref[...] = x_new

    @pl.when(l == pl.num_programs(0) - 1)
    def _pooler_classifier():
        # CLS rows (first token of each sequence): tiny static-sliced sublane concat,
        # replaces the separate pooler kernel launch + XLA strided gather.
        cls = jnp.concatenate([x_new[b * S:b * S + 1, :] for b in range(B)], axis=0)
        pooled = jnp.tanh(jnp.dot(cls.astype(jnp.bfloat16), wp_ref[...],
                                  preferred_element_type=jnp.float32) + bp_ref[...])
        logits_ref[...] = jnp.dot(pooled.astype(jnp.bfloat16), wf_ref[...],
                                  preferred_element_type=jnp.float32) + bf_ref[...]


def bert_encoder_head(emb, attn_mask, packed, *, B, S):
    M = B * S
    L, _, W3 = packed["wqkv"].shape

    def const(shape):
        return pl.BlockSpec(shape, lambda l: (0, 0))

    def per_layer(shape):
        return pl.BlockSpec((None,) + shape, lambda l: (l, 0, 0))

    grid_spec = pltpu.PrefetchScalarGridSpec(
        num_scalar_prefetch=0,
        grid=(L,),
        in_specs=[
            const((M, HIDDEN)),            # embeddings
            const((M, M)),                 # additive attention mask
            const((1, HIDDEN)),            # emb LN gamma
            const((1, HIDDEN)),            # emb LN beta
            per_layer((HIDDEN, W3)),       # packed [q|k|vo] weights (bf16)
            per_layer((1, W3)),            # packed q/k biases
            per_layer((1, HIDDEN)),        # bo' = bo + bv @ Wo
            per_layer((1, HIDDEN)),        # ln1 gamma
            per_layer((1, HIDDEN)),        # ln1 beta
            per_layer((HIDDEN, INTER)),    # w1 (bf16)
            per_layer((1, INTER)),         # b1
            per_layer((INTER, HIDDEN)),    # w2 (bf16)
            per_layer((1, HIDDEN)),        # b2
            per_layer((1, HIDDEN)),        # ln2 gamma
            per_layer((1, HIDDEN)),        # ln2 beta
            const((HIDDEN, HIDDEN)),       # pooler weight (bf16)
            const((1, HIDDEN)),            # pooler bias
            const((HIDDEN, LANE)),         # classifier weight, zero-padded to 128 lanes
            const((1, LANE)),              # classifier bias, padded
        ],
        out_specs=pl.BlockSpec((B, LANE), lambda l: (0, 0)),
        scratch_shapes=[pltpu.VMEM((M, HIDDEN), jnp.float32)],   # residual stream
    )
    return pl.pallas_call(
        functools.partial(_encoder_kernel, B=B, S=S, heads=HEADS,
                          lane=LANE, eps=LN_EPS),
        out_shape=jax.ShapeDtypeStruct((B, LANE), jnp.float32),
        grid_spec=grid_spec,
        compiler_params=pltpu.CompilerParams(
            # Layer axis carries the residual stream -> sequential.
            # TODO(synk): on v7x (2 TCs) with larger B*S, add a leading "parallel"
            # row-block axis; at real BERT sizes also set vmem_limit_bytes and tile
            # w1/w2 over an inner K axis (v7x VMEM is 64 MiB).
            dimension_semantics=("arbitrary",)),
    )(emb, attn_mask, packed["emb_ln_g"], packed["emb_ln_b"],
      packed["wqkv"], packed["bqkv"], packed["bo2"],
      packed["ln1g"], packed["ln1b"], packed["w1"], packed["b1"],
      packed["w2"], packed["b2"], packed["ln2g"], packed["ln2b"],
      packed["w_pool"], packed["b_pool"], packed["w_fc_pad"], packed["b_fc_pad"])


# ----------------------------- forward (per-call glue only) --------------------
def disaster_net_forward(packed, ids, mask):
    B, S = ids.shape
    M = B * S

    # Embedding gather + sum (plain-JAX glue); the embedding LN runs in the kernel.
    emb = (packed["word_emb"][ids]
           + packed["pos_emb"][:S][None, :, :]
           + packed["type_emb"][0][None, None, :]).reshape(M, HIDDEN).astype(jnp.float32)

    # (M, M) additive mask: block-diagonal over sequences + key padding (HF convention).
    keep = mask.astype(jnp.float32)                              # (B, S)
    same = jnp.eye(B, dtype=jnp.float32)                         # (B, B)
    allow = same[:, None, :, None] * keep[None, None, :, :]      # (B, 1, B, S)
    allow = jnp.broadcast_to(allow, (B, S, B, S)).reshape(M, M)
    attn_mask = (1.0 - allow) * -10000.0

    logits_pad = bert_encoder_head(emb, attn_mask, packed, B=B, S=S)
    return logits_pad[:, :N_CLASSES]


# ----------------------------- one-time parameter packing ----------------------
def pack_params(params):
    """Hoisted out of the jitted forward: per-head Q/K padded to full 128-lane tiles
    with 1/sqrt(dh) folded into Q, Wo folded into per-head V (and bv into bo'),
    bf16 casts for every MXU weight, classifier padded to 128 output lanes."""
    scale = 1.0 / (HEAD_DIM ** 0.5)
    pad = LANE - HEAD_DIM

    def stack(fn, dtype=None):
        out = jnp.stack([fn(p) for p in params["layers"]])
        return out.astype(dtype) if dtype is not None else out

    def pack_qkv_w(p):
        tiles = []
        for h in range(HEADS):
            sl = slice(h * HEAD_DIM, (h + 1) * HEAD_DIM)
            tiles.append(jnp.pad(p["wq"][:, sl] * scale, ((0, 0), (0, pad))))
            tiles.append(jnp.pad(p["wk"][:, sl], ((0, 0), (0, pad))))
            tiles.append(p["wv"][:, sl] @ p["wo"][sl, :])        # Wvo[h]: (H, H)
        return jnp.concatenate(tiles, axis=1)

    def pack_qkv_b(p):
        tiles = []
        for h in range(HEADS):
            sl = slice(h * HEAD_DIM, (h + 1) * HEAD_DIM)
            tiles.append(jnp.pad(p["bq"][sl] * scale, (0, pad)))
            tiles.append(jnp.pad(p["bk"][sl], (0, pad)))
            tiles.append(jnp.zeros((HIDDEN,), jnp.float32))       # bv folded into bo'
        return jnp.concatenate(tiles)[None, :]

    return {
        "word_emb": params["word_emb"],
        "pos_emb": params["pos_emb"],
        "type_emb": params["type_emb"],
        "emb_ln_g": params["emb_ln_g"][None, :],
        "emb_ln_b": params["emb_ln_b"][None, :],
        "wqkv": stack(pack_qkv_w, jnp.bfloat16),                  # (L, H, HEADS*(2*LANE+H))
        "bqkv": stack(pack_qkv_b),
        "bo2": stack(lambda p: (p["bo"] + p["bv"] @ p["wo"])[None, :]),
        "ln1g": stack(lambda p: p["ln1_g"][None, :]),
        "ln1b": stack(lambda p: p["ln1_b"][None, :]),
        "w1": stack(lambda p: p["w1"], jnp.bfloat16),
        "b1": stack(lambda p: p["b1"][None, :]),
        "w2": stack(lambda p: p["w2"], jnp.bfloat16),
        "b2": stack(lambda p: p["b2"][None, :]),
        "ln2g": stack(lambda p: p["ln2_g"][None, :]),
        "ln2b": stack(lambda p: p["ln2_b"][None, :]),
        "w_pool": params["w_pool"].astype(jnp.bfloat16),
        "b_pool": params["b_pool"][None, :],
        "w_fc_pad": jnp.zeros((HIDDEN, LANE), jnp.float32)
                      .at[:, :N_CLASSES].set(params["w_fc"]).astype(jnp.bfloat16),
        "b_fc_pad": jnp.zeros((1, LANE), jnp.float32)
                      .at[0, :N_CLASSES].set(params["b_fc"]),
    }


# ----------------------------- deterministic params ----------------------------
def init_params(key):
    def dense(k, fan_in, fan_out):
        return (jax.random.normal(k, (fan_in, fan_out), jnp.float32) * 0.02,
                jnp.zeros((fan_out,), jnp.float32))

    keys = jax.random.split(key, 8 + LAYERS)
    params = {
        "word_emb": jax.random.normal(keys[0], (VOCAB, HIDDEN), jnp.float32) * 0.02,
        "pos_emb": jax.random.normal(keys[1], (MAX_POS, HIDDEN), jnp.float32) * 0.02,
        "type_emb": jax.random.normal(keys[2], (2, HIDDEN), jnp.float32) * 0.02,
        "emb_ln_g": jnp.ones((HIDDEN,), jnp.float32),
        "emb_ln_b": jnp.zeros((HIDDEN,), jnp.float32),
    }
    layers = []
    for li in range(LAYERS):
        lk = jax.random.split(keys[3 + li], 6)
        wq, bq = dense(lk[0], HIDDEN, HIDDEN)
        wk, bk = dense(lk[1], HIDDEN, HIDDEN)
        wv, bv = dense(lk[2], HIDDEN, HIDDEN)
        wo, bo = dense(lk[3], HIDDEN, HIDDEN)
        w1, b1 = dense(lk[4], HIDDEN, INTER)
        w2, b2 = dense(lk[5], INTER, HIDDEN)
        layers.append(dict(
            wq=wq, bq=bq, wk=wk, bk=bk, wv=wv, bv=bv, wo=wo, bo=bo,
            w1=w1, b1=b1, w2=w2, b2=b2,
            ln1_g=jnp.ones((HIDDEN,), jnp.float32),
            ln1_b=jnp.zeros((HIDDEN,), jnp.float32),
            ln2_g=jnp.ones((HIDDEN,), jnp.float32),
            ln2_b=jnp.zeros((HIDDEN,), jnp.float32),
        ))
    params["layers"] = layers
    params["w_pool"], params["b_pool"] = dense(keys[3 + LAYERS], HIDDEN, HIDDEN)
    params["w_fc"], params["b_fc"] = dense(keys[4 + LAYERS], HIDDEN, N_CLASSES)
    return params


# ----------------------------- main ---------------------------------------------
if __name__ == "__main__":
    key = jax.random.PRNGKey(0)
    k_params, k_ids = jax.random.split(key)

    B, S = 2, 8
    params = init_params(k_params)
    packed = pack_params(params)   # one-time packing, outside the jitted forward
    ids = jax.random.randint(k_ids, (B, S), 0, VOCAB, dtype=jnp.int32)
    # attention mask: second sequence has 2 padding tokens at the end
    mask = jnp.array(
        [[1, 1, 1, 1, 1, 1, 1, 1],
         [1, 1, 1, 1, 1, 1, 0, 0]], dtype=jnp.float32)

    logits = jax.jit(disaster_net_forward)(packed, ids, mask)
    logits = jax.block_until_ready(logits)
    assert logits.shape == (B, N_CLASSES)
    assert bool(jnp.all(jnp.isfinite(logits)))
    print("KERNEL_OK")
</pallas_src>

<mosaic_0001>
module attributes {stable_mosaic.version = 11 : i64} {
  func.func @_encoder_kernel(%arg0: i32, %arg1: memref<16x128xf32, #tpu.memory_space<vmem>>, %arg2: memref<16x16xf32, #tpu.memory_space<vmem>>, %arg3: memref<1x128xf32, #tpu.memory_space<vmem>>, %arg4: memref<1x128xf32, #tpu.memory_space<vmem>>, %arg5: memref<1x128x768xbf16, #tpu.memory_space<vmem>>, %arg6: memref<1x1x768xf32, #tpu.memory_space<vmem>>, %arg7: memref<1x1x128xf32, #tpu.memory_space<vmem>>, %arg8: memref<1x1x128xf32, #tpu.memory_space<vmem>>, %arg9: memref<1x1x128xf32, #tpu.memory_space<vmem>>, %arg10: memref<1x128x512xbf16, #tpu.memory_space<vmem>>, %arg11: memref<1x1x512xf32, #tpu.memory_space<vmem>>, %arg12: memref<1x512x128xbf16, #tpu.memory_space<vmem>>, %arg13: memref<1x1x128xf32, #tpu.memory_space<vmem>>, %arg14: memref<1x1x128xf32, #tpu.memory_space<vmem>>, %arg15: memref<1x1x128xf32, #tpu.memory_space<vmem>>, %arg16: memref<128x128xbf16, #tpu.memory_space<vmem>>, %arg17: memref<1x128xf32, #tpu.memory_space<vmem>>, %arg18: memref<128x128xbf16, #tpu.memory_space<vmem>>, %arg19: memref<1x128xf32, #tpu.memory_space<vmem>>, %arg20: memref<2x128xf32, #tpu.memory_space<vmem>>, %arg21: memref<16x128xf32, #tpu.memory_space<vmem>>) attributes {dimension_semantics = [#tpu.dimension_semantics<arbitrary>], iteration_bounds = array<i64: 2>, scalar_prefetch = 0 : i64, scratch_operands = 1 : i64, tpu.core_type = #tpu.core_type<tc>, window_params = [{pipeline_mode = #tpu.pipeline_mode<synchronous>, transform_indices = @transform_0, window_bounds = array<i64: 16, 128>}, {pipeline_mode = #tpu.pipeline_mode<synchronous>, transform_indices = @transform_1, window_bounds = array<i64: 16, 16>}, {pipeline_mode = #tpu.pipeline_mode<synchronous>, transform_indices = @transform_2, window_bounds = array<i64: 1, 128>}, {pipeline_mode = #tpu.pipeline_mode<synchronous>, transform_indices = @transform_3, window_bounds = array<i64: 1, 128>}, {transform_indices = @transform_4, window_bounds = array<i64: 1, 128, 768>}, {transform_indices = @transform_5, window_bounds = array<i64: 1, 1, 768>}, {transform_indices = @transform_6, window_bounds = array<i64: 1, 1, 128>}, {transform_indices = @transform_7, window_bounds = array<i64: 1, 1, 128>}, {transform_indices = @transform_8, window_bounds = array<i64: 1, 1, 128>}, {transform_indices = @transform_9, window_bounds = array<i64: 1, 128, 512>}, {transform_indices = @transform_10, window_bounds = array<i64: 1, 1, 512>}, {transform_indices = @transform_11, window_bounds = array<i64: 1, 512, 128>}, {transform_indices = @transform_12, window_bounds = array<i64: 1, 1, 128>}, {transform_indices = @transform_13, window_bounds = array<i64: 1, 1, 128>}, {transform_indices = @transform_14, window_bounds = array<i64: 1, 1, 128>}, {pipeline_mode = #tpu.pipeline_mode<synchronous>, transform_indices = @transform_15, window_bounds = array<i64: 128, 128>}, {pipeline_mode = #tpu.pipeline_mode<synchronous>, transform_indices = @transform_16, window_bounds = array<i64: 1, 128>}, {pipeline_mode = #tpu.pipeline_mode<synchronous>, transform_indices = @transform_17, window_bounds = array<i64: 128, 128>}, {pipeline_mode = #tpu.pipeline_mode<synchronous>, transform_indices = @transform_18, window_bounds = array<i64: 1, 128>}, {pipeline_mode = #tpu.pipeline_mode<synchronous>, transform_indices = @transform_19, window_bounds = array<i64: 2, 128>}]} {
    %c0_i32 = arith.constant 0 : i32
    %0 = arith.cmpi eq, %arg0, %c0_i32 : i32
    %1 = arith.extui %0 : i1 to i32
    %c0_i32_0 = arith.constant 0 : i32
    %2 = arith.cmpi ne, %1, %c0_i32_0 : i32
    scf.if %2 {
      %c0_64 = arith.constant 0 : index
      %c0_65 = arith.constant 0 : index
      %136 = vector.load %arg1[%c0_64, %c0_65] : memref<16x128xf32, #tpu.memory_space<vmem>>, vector<16x128xf32>
      %c0_66 = arith.constant 0 : index
      %c0_67 = arith.constant 0 : index
      %137 = vector.load %arg3[%c0_66, %c0_67] : memref<1x128xf32, #tpu.memory_space<vmem>>, vector<1x128xf32>
      %c0_68 = arith.constant 0 : index
      %c0_69 = arith.constant 0 : index
      %138 = vector.load %arg4[%c0_68, %c0_69] : memref<1x128xf32, #tpu.memory_space<vmem>>, vector<1x128xf32>
      %cst_70 = arith.constant dense<0.000000e+00> : vector<16xf32>
      %139 = vector.multi_reduction <add>, %136, %cst_70 [1] : vector<16x128xf32> to vector<16xf32>
      %140 = vector.shape_cast %139 : vector<16xf32> to vector<16x1xf32>
      %cst_71 = arith.constant 1.280000e+02 : f32
      %141 = vector.broadcast %cst_71 : f32 to vector<16x1xf32>
      %142 = arith.divf %140, %141 : vector<16x1xf32>
      %143 = vector.broadcast %142 : vector<16x1xf32> to vector<16x128xf32>
      %144 = arith.subf %136, %143 : vector<16x128xf32>
      %145 = arith.mulf %144, %144 : vector<16x128xf32>
      %cst_72 = arith.constant dense<0.000000e+00> : vector<16xf32>
      %146 = vector.multi_reduction <add>, %145, %cst_72 [1] : vector<16x128xf32> to vector<16xf32>
      %147 = vector.shape_cast %146 : vector<16xf32> to vector<16x1xf32>
      %cst_73 = arith.constant 1.280000e+02 : f32
      %148 = vector.broadcast %cst_73 : f32 to vector<16x1xf32>
      %149 = arith.divf %147, %148 : vector<16x1xf32>
      %cst_74 = arith.constant 9.99999996E-13 : f32
      %150 = vector.broadcast %cst_74 : f32 to vector<16x1xf32>
      %151 = arith.addf %149, %150 : vector<16x1xf32>
      %152 = math.rsqrt %151 : vector<16x1xf32>
      %153 = vector.broadcast %152 : vector<16x1xf32> to vector<16x128xf32>
      %154 = arith.mulf %144, %153 : vector<16x128xf32>
      %155 = vector.broadcast %137 : vector<1x128xf32> to vector<16x128xf32>
      %156 = arith.mulf %154, %155 : vector<16x128xf32>
      %157 = vector.broadcast %138 : vector<1x128xf32> to vector<16x128xf32>
      %158 = arith.addf %156, %157 : vector<16x128xf32>
      %c0_75 = arith.constant 0 : index
      %c0_76 = arith.constant 0 : index
      %159 = vector.load %arg21[%c0_75, %c0_76] : memref<16x128xf32, #tpu.memory_space<vmem>>, vector<16x128xf32>
      tpu.vector_store %arg21[%c0_75, %c0_76], %158 {strides = array<i32>} : memref<16x128xf32, #tpu.memory_space<vmem>>, vector<16x128xf32>,
    } else {
    }
    %c0 = arith.constant 0 : index
    %c0_1 = arith.constant 0 : index
    %3 = vector.load %arg21[%c0, %c0_1] : memref<16x128xf32, #tpu.memory_space<vmem>>, vector<16x128xf32>
    %4 = arith.truncf %3 : vector<16x128xf32> to vector<16x128xbf16>
    %c0_2 = arith.constant 0 : index
    %c0_3 = arith.constant 0 : index
    %c0_4 = arith.constant 0 : index
    %5 = vector.load %arg5[%c0_2, %c0_3, %c0_4] : memref<1x128x768xbf16, #tpu.memory_space<vmem>>, vector<1x128x768xbf16>
    %6 = vector.shape_cast %5 : vector<1x128x768xbf16> to vector<128x768xbf16>
    %cst = arith.constant dense<0.000000e+00> : vector<16x768xf32>
    %7 = tpu.matmul %4, %6, %cst {dimension_numbers = #tpu.dot_dimension_numbers<[1], [0], [0], [1], [0, 0, 1, 1], [], []>} : vector<16x128xbf16>, vector<128x768xbf16>, vector<16x768xf32> -> vector<16x768xf32>
    %c0_5 = arith.constant 0 : index
    %c0_6 = arith.constant 0 : index
    %c0_7 = arith.constant 0 : index
    %8 = vector.load %arg6[%c0_5, %c0_6, %c0_7] : memref<1x1x768xf32, #tpu.memory_space<vmem>>, vector<1x1x768xf32>
    %9 = vector.shape_cast %8 : vector<1x1x768xf32> to vector<1x768xf32>
    %10 = vector.broadcast %9 : vector<1x768xf32> to vector<16x768xf32>
    %11 = arith.addf %7, %10 : vector<16x768xf32>
    %12 = arith.truncf %11 : vector<16x768xf32> to vector<16x768xbf16>
    %c0_8 = arith.constant 0 : index
    %c0_9 = arith.constant 0 : index
    %13 = vector.load %arg2[%c0_8, %c0_9] : memref<16x16xf32, #tpu.memory_space<vmem>>, vector<16x16xf32>
    %14 = vector.extract_strided_slice %12 {offsets = [0, 0], sizes = [16, 128], strides = [1, 1]} : vector<16x768xbf16> to vector<16x128xbf16>
    %15 = vector.extract_strided_slice %12 {offsets = [0, 128], sizes = [16, 128], strides = [1, 1]} : vector<16x768xbf16> to vector<16x128xbf16>
    %16 = vector.extract_strided_slice %12 {offsets = [0, 256], sizes = [16, 128], strides = [1, 1]} : vector<16x768xbf16> to vector<16x128xbf16>
    %cst_10 = arith.constant dense<0.000000e+00> : vector<16x16xf32>
    %17 = tpu.matmul %14, %15, %cst_10 {dimension_numbers = #tpu.dot_dimension_numbers<[1], [1], [0], [0], [0, 0, 1, 0], [], []>} : vector<16x128xbf16>, vector<16x128xbf16>, vector<16x16xf32> -> vector<16x16xf32>
    %18 = arith.addf %17, %13 : vector<16x16xf32>
    %cst_11 = arith.constant dense<0xFF800000> : vector<16xf32>
    %19 = vector.multi_reduction <maximumf>, %18, %cst_11 [1] : vector<16x16xf32> to vector<16xf32>
    %20 = vector.shape_cast %19 : vector<16xf32> to vector<16x1xf32>
    %21 = vector.broadcast %20 : vector<16x1xf32> to vector<16x16xf32>
    %22 = arith.subf %18, %21 : vector<16x16xf32>
    %23 = math.exp %22 : vector<16x16xf32>
    %cst_12 = arith.constant dense<0.000000e+00> : vector<16xf32>
    %24 = vector.multi_reduction <add>, %23, %cst_12 [1] : vector<16x16xf32> to vector<16xf32>
    %25 = vector.shape_cast %24 : vector<16xf32> to vector<16x1xf32>
    %26 = tpu.reciprocal %25 {approx = true} : vector<16x1xf32> -> vector<16x1xf32>
    %27 = vector.broadcast %26 : vector<16x1xf32> to vector<16x16xf32>
    %28 = arith.mulf %23, %27 : vector<16x16xf32>
    %29 = arith.truncf %28 : vector<16x16xf32> to vector<16x16xbf16>
    %cst_13 = arith.constant dense<0.000000e+00> : vector<16x128xf32>
    %30 = tpu.matmul %29, %16, %cst_13 {dimension_numbers = #tpu.dot_dimension_numbers<[1], [0], [0], [1], [0, 0, 1, 1], [], []>} : vector<16x16xbf16>, vector<16x128xbf16>, vector<16x128xf32> -> vector<16x128xf32>
    %31 = vector.extract_strided_slice %12 {offsets = [0, 384], sizes = [16, 128], strides = [1, 1]} : vector<16x768xbf16> to vector<16x128xbf16>
    %32 = vector.extract_strided_slice %12 {offsets = [0, 512], sizes = [16, 128], strides = [1, 1]} : vector<16x768xbf16> to vector<16x128xbf16>
    %33 = vector.extract_strided_slice %12 {offsets = [0, 640], sizes = [16, 128], strides = [1, 1]} : vector<16x768xbf16> to vector<16x128xbf16>
    %cst_14 = arith.constant dense<0.000000e+00> : vector<16x16xf32>
    %34 = tpu.matmul %31, %32, %cst_14 {dimension_numbers = #tpu.dot_dimension_numbers<[1], [1], [0], [0], [0, 0, 1, 0], [], []>} : vector<16x128xbf16>, vector<16x128xbf16>, vector<16x16xf32> -> vector<16x16xf32>
    %35 = arith.addf %34, %13 : vector<16x16xf32>
    %cst_15 = arith.constant dense<0xFF800000> : vector<16xf32>
    %36 = vector.multi_reduction <maximumf>, %35, %cst_15 [1] : vector<16x16xf32> to vector<16xf32>
    %37 = vector.shape_cast %36 : vector<16xf32> to vector<16x1xf32>
    %38 = vector.broadcast %37 : vector<16x1xf32> to vector<16x16xf32>
    %39 = arith.subf %35, %38 : vector<16x16xf32>
    %40 = math.exp %39 : vector<16x16xf32>
    %cst_16 = arith.constant dense<0.000000e+00> : vector<16xf32>
    %41 = vector.multi_reduction <add>, %40, %cst_16 [1] : vector<16x16xf32> to vector<16xf32>
    %42 = vector.shape_cast %41 : vector<16xf32> to vector<16x1xf32>
    %43 = tpu.reciprocal %42 {approx = true} : vector<16x1xf32> -> vector<16x1xf32>
    %44 = vector.broadcast %43 : vector<16x1xf32> to vector<16x16xf32>
    %45 = arith.mulf %40, %44 : vector<16x16xf32>
    %46 = arith.truncf %45 : vector<16x16xf32> to vector<16x16xbf16>
    %cst_17 = arith.constant dense<0.000000e+00> : vector<16x128xf32>
    %47 = tpu.matmul %46, %33, %cst_17 {dimension_numbers = #tpu.dot_dimension_numbers<[1], [0], [0], [1], [0, 0, 1, 1], [], []>} : vector<16x16xbf16>, vector<16x128xbf16>, vector<16x128xf32> -> vector<16x128xf32>
    %48 = arith.addf %30, %47 : vector<16x128xf32>
    %c0_18 = arith.constant 0 : index
    %c0_19 = arith.constant 0 : index
    %c0_20 = arith.constant 0 : index
    %49 = vector.load %arg7[%c0_18, %c0_19, %c0_20] : memref<1x1x128xf32, #tpu.memory_space<vmem>>, vector<1x1x128xf32>
    %50 = vector.shape_cast %49 : vector<1x1x128xf32> to vector<1x128xf32>
    %51 = vector.broadcast %50 : vector<1x128xf32> to vector<16x128xf32>
    %52 = arith.addf %48, %51 : vector<16x128xf32>
    %53 = arith.addf %52, %3 : vector<16x128xf32>
    %c0_21 = arith.constant 0 : index
    %c0_22 = arith.constant 0 : index
    %c0_23 = arith.constant 0 : index
    %54 = vector.load %arg8[%c0_21, %c0_22, %c0_23] : memref<1x1x128xf32, #tpu.memory_space<vmem>>, vector<1x1x128xf32>
    %55 = vector.shape_cast %54 : vector<1x1x128xf32> to vector<1x128xf32>
    %c0_24 = arith.constant 0 : index
    %c0_25 = arith.constant 0 : index
    %c0_26 = arith.constant 0 : index
    %56 = vector.load %arg9[%c0_24, %c0_25, %c0_26] : memref<1x1x128xf32, #tpu.memory_space<vmem>>, vector<1x1x128xf32>
    %57 = vector.shape_cast %56 : vector<1x1x128xf32> to vector<1x128xf32>
    %cst_27 = arith.constant dense<0.000000e+00> : vector<16xf32>
    %58 = vector.multi_reduction <add>, %53, %cst_27 [1] : vector<16x128xf32> to vector<16xf32>
    %59 = vector.shape_cast %58 : vector<16xf32> to vector<16x1xf32>
    %cst_28 = arith.constant 1.280000e+02 : f32
    %60 = vector.broadcast %cst_28 : f32 to vector<16x1xf32>
    %61 = arith.divf %59, %60 : vector<16x1xf32>
    %62 = vector.broadcast %61 : vector<16x1xf32> to vector<16x128xf32>
    %63 = arith.subf %53, %62 : vector<16x128xf32>
    %64 = arith.mulf %63, %63 : vector<16x128xf32>
    %cst_29 = arith.constant dense<0.000000e+00> : vector<16xf32>
    %65 = vector.multi_reduction <add>, %64, %cst_29 [1] : vector<16x128xf32> to vector<16xf32>
    %66 = vector.shape_cast %65 : vector<16xf32> to vector<16x1xf32>
    %cst_30 = arith.constant 1.280000e+02 : f32
    %67 = vector.broadcast %cst_30 : f32 to vector<16x1xf32>
    %68 = arith.divf %66, %67 : vector<16x1xf32>
    %cst_31 = arith.constant 9.99999996E-13 : f32
    %69 = vector.broadcast %cst_31 : f32 to vector<16x1xf32>
    %70 = arith.addf %68, %69 : vector<16x1xf32>
    %71 = math.rsqrt %70 : vector<16x1xf32>
    %72 = vector.broadcast %71 : vector<16x1xf32> to vector<16x128xf32>
    %73 = arith.mulf %63, %72 : vector<16x128xf32>
    %74 = vector.broadcast %55 : vector<1x128xf32> to vector<16x128xf32>
    %75 = arith.mulf %73, %74 : vector<16x128xf32>
    %76 = vector.broadcast %57 : vector<1x128xf32> to vector<16x128xf32>
    %77 = arith.addf %75, %76 : vector<16x128xf32>
    %78 = arith.truncf %77 : vector<16x128xf32> to vector<16x128xbf16>
    %c0_32 = arith.constant 0 : index
    %c0_33 = arith.constant 0 : index
    %c0_34 = arith.constant 0 : index
    %79 = vector.load %arg10[%c0_32, %c0_33, %c0_34] : memref<1x128x512xbf16, #tpu.memory_space<vmem>>, vector<1x128x512xbf16>
    %80 = vector.shape_cast %79 : vector<1x128x512xbf16> to vector<128x512xbf16>
    %cst_35 = arith.constant dense<0.000000e+00> : vector<16x512xf32>
    %81 = tpu.matmul %78, %80, %cst_35 {dimension_numbers = #tpu.dot_dimension_numbers<[1], [0], [0], [1], [0, 0, 1, 1], [], []>} : vector<16x128xbf16>, vector<128x512xbf16>, vector<16x512xf32> -> vector<16x512xf32>
    %c0_36 = arith.constant 0 : index
    %c0_37 = arith.constant 0 : index
    %c0_38 = arith.constant 0 : index
    %82 = vector.load %arg11[%c0_36, %c0_37, %c0_38] : memref<1x1x512xf32, #tpu.memory_space<vmem>>, vector<1x1x512xf32>
    %83 = vector.shape_cast %82 : vector<1x1x512xf32> to vector<1x512xf32>
    %84 = vector.broadcast %83 : vector<1x512xf32> to vector<16x512xf32>
    %85 = arith.addf %81, %84 : vector<16x512xf32>
    %cst_39 = arith.constant 5.000000e-01 : f32
    %86 = vector.broadcast %cst_39 : f32 to vector<16x512xf32>
    %87 = arith.mulf %86, %85 : vector<16x512xf32>
    %cst_40 = arith.constant 4.471500e-02 : f32
    %88 = vector.broadcast %cst_40 : f32 to vector<16x512xf32>
    %89 = arith.mulf %88, %85 : vector<16x512xf32>
    %90 = arith.mulf %89, %85 : vector<16x512xf32>
    %91 = arith.mulf %90, %85 : vector<16x512xf32>
    %92 = arith.addf %85, %91 : vector<16x512xf32>
    %cst_41 = arith.constant 0.797884583 : f32
    %93 = vector.broadcast %cst_41 : f32 to vector<16x512xf32>
    %94 = arith.mulf %93, %92 : vector<16x512xf32>
    %95 = math.tanh %94 : vector<16x512xf32>
    %cst_42 = arith.constant 1.000000e+00 : f32
    %96 = vector.broadcast %cst_42 : f32 to vector<16x512xf32>
    %97 = arith.addf %96, %95 : vector<16x512xf32>
    %98 = arith.mulf %87, %97 : vector<16x512xf32>
    %99 = arith.truncf %98 : vector<16x512xf32> to vector<16x512xbf16>
    %c0_43 = arith.constant 0 : index
    %c0_44 = arith.constant 0 : index
    %c0_45 = arith.constant 0 : index
    %100 = vector.load %arg12[%c0_43, %c0_44, %c0_45] : memref<1x512x128xbf16, #tpu.memory_space<vmem>>, vector<1x512x128xbf16>
    %101 = vector.shape_cast %100 : vector<1x512x128xbf16> to vector<512x128xbf16>
    %cst_46 = arith.constant dense<0.000000e+00> : vector<16x128xf32>
    %102 = tpu.matmul %99, %101, %cst_46 {dimension_numbers = #tpu.dot_dimension_numbers<[1], [0], [0], [1], [0, 0, 1, 1], [], []>} : vector<16x512xbf16>, vector<512x128xbf16>, vector<16x128xf32> -> vector<16x128xf32>
    %c0_47 = arith.constant 0 : index
    %c0_48 = arith.constant 0 : index
    %c0_49 = arith.constant 0 : index
    %103 = vector.load %arg13[%c0_47, %c0_48, %c0_49] : memref<1x1x128xf32, #tpu.memory_space<vmem>>, vector<1x1x128xf32>
    %104 = vector.shape_cast %103 : vector<1x1x128xf32> to vector<1x128xf32>
    %105 = vector.broadcast %104 : vector<1x128xf32> to vector<16x128xf32>
    %106 = arith.addf %102, %105 : vector<16x128xf32>
    %107 = arith.addf %106, %77 : vector<16x128xf32>
    %c0_50 = arith.constant 0 : index
    %c0_51 = arith.constant 0 : index
    %c0_52 = arith.constant 0 : index
    %108 = vector.load %arg14[%c0_50, %c0_51, %c0_52] : memref<1x1x128xf32, #tpu.memory_space<vmem>>, vector<1x1x128xf32>
    %109 = vector.shape_cast %108 : vector<1x1x128xf32> to vector<1x128xf32>
    %c0_53 = arith.constant 0 : index
    %c0_54 = arith.constant 0 : index
    %c0_55 = arith.constant 0 : index
    %110 = vector.load %arg15[%c0_53, %c0_54, %c0_55] : memref<1x1x128xf32, #tpu.memory_space<vmem>>, vector<1x1x128xf32>
    %111 = vector.shape_cast %110 : vector<1x1x128xf32> to vector<1x128xf32>
    %cst_56 = arith.constant dense<0.000000e+00> : vector<16xf32>
    %112 = vector.multi_reduction <add>, %107, %cst_56 [1] : vector<16x128xf32> to vector<16xf32>
    %113 = vector.shape_cast %112 : vector<16xf32> to vector<16x1xf32>
    %cst_57 = arith.constant 1.280000e+02 : f32
    %114 = vector.broadcast %cst_57 : f32 to vector<16x1xf32>
    %115 = arith.divf %113, %114 : vector<16x1xf32>
    %116 = vector.broadcast %115 : vector<16x1xf32> to vector<16x128xf32>
    %117 = arith.subf %107, %116 : vector<16x128xf32>
    %118 = arith.mulf %117, %117 : vector<16x128xf32>
    %cst_58 = arith.constant dense<0.000000e+00> : vector<16xf32>
    %119 = vector.multi_reduction <add>, %118, %cst_58 [1] : vector<16x128xf32> to vector<16xf32>
    %120 = vector.shape_cast %119 : vector<16xf32> to vector<16x1xf32>
    %cst_59 = arith.constant 1.280000e+02 : f32
    %121 = vector.broadcast %cst_59 : f32 to vector<16x1xf32>
    %122 = arith.divf %120, %121 : vector<16x1xf32>
    %cst_60 = arith.constant 9.99999996E-13 : f32
    %123 = vector.broadcast %cst_60 : f32 to vector<16x1xf32>
    %124 = arith.addf %122, %123 : vector<16x1xf32>
    %125 = math.rsqrt %124 : vector<16x1xf32>
    %126 = vector.broadcast %125 : vector<16x1xf32> to vector<16x128xf32>
    %127 = arith.mulf %117, %126 : vector<16x128xf32>
    %128 = vector.broadcast %109 : vector<1x128xf32> to vector<16x128xf32>
    %129 = arith.mulf %127, %128 : vector<16x128xf32>
    %130 = vector.broadcast %111 : vector<1x128xf32> to vector<16x128xf32>
    %131 = arith.addf %129, %130 : vector<16x128xf32>
    %c0_61 = arith.constant 0 : index
    %c0_62 = arith.constant 0 : index
    %132 = vector.load %arg21[%c0_61, %c0_62] : memref<16x128xf32, #tpu.memory_space<vmem>>, vector<16x128xf32>
    tpu.vector_store %arg21[%c0_61, %c0_62], %131 {strides = array<i32>} : memref<16x128xf32, #tpu.memory_space<vmem>>, vector<16x128xf32>,
    %c1_i32 = arith.constant 1 : i32
    %133 = arith.cmpi eq, %arg0, %c1_i32 : i32
    %134 = arith.extui %133 : i1 to i32
    %c0_i32_63 = arith.constant 0 : i32
    %135 = arith.cmpi ne, %134, %c0_i32_63 : i32
    scf.if %135 {
      %136 = vector.extract_strided_slice %131 {offsets = [0, 0], sizes = [1, 128], strides = [1, 1]} : vector<16x128xf32> to vector<1x128xf32>
      %137 = vector.extract_strided_slice %131 {offsets = [8, 0], sizes = [1, 128], strides = [1, 1]} : vector<16x128xf32> to vector<1x128xf32>
      %138 = tpu.concatenate %136, %137 in 0 : vector<1x128xf32>, vector<1x128xf32> -> vector<2x128xf32>
      %139 = arith.truncf %138 : vector<2x128xf32> to vector<2x128xbf16>
      %c0_64 = arith.constant 0 : index
      %c0_65 = arith.constant 0 : index
      %140 = vector.load %arg16[%c0_64, %c0_65] : memref<128x128xbf16, #tpu.memory_space<vmem>>, vector<128x128xbf16>
      %cst_66 = arith.constant dense<0.000000e+00> : vector<2x128xf32>
      %141 = tpu.matmul %139, %140, %cst_66 {dimension_numbers = #tpu.dot_dimension_numbers<[1], [0], [0], [1], [0, 0, 1, 1], [], []>} : vector<2x128xbf16>, vector<128x128xbf16>, vector<2x128xf32> -> vector<2x128xf32>
      %c0_67 = arith.constant 0 : index
      %c0_68 = arith.constant 0 : index
      %142 = vector.load %arg17[%c0_67, %c0_68] : memref<1x128xf32, #tpu.memory_space<vmem>>, vector<1x128xf32>
      %143 = vector.broadcast %142 : vector<1x128xf32> to vector<2x128xf32>
      %144 = arith.addf %141, %143 : vector<2x128xf32>
      %145 = math.tanh %144 : vector<2x128xf32>
      %146 = arith.truncf %145 : vector<2x128xf32> to vector<2x128xbf16>
      %c0_69 = arith.constant 0 : index
      %c0_70 = arith.constant 0 : index
      %147 = vector.load %arg18[%c0_69, %c0_70] : memref<128x128xbf16, #tpu.memory_space<vmem>>, vector<128x128xbf16>
      %cst_71 = arith.constant dense<0.000000e+00> : vector<2x128xf32>
      %148 = tpu.matmul %146, %147, %cst_71 {dimension_numbers = #tpu.dot_dimension_numbers<[1], [0], [0], [1], [0, 0, 1, 1], [], []>} : vector<2x128xbf16>, vector<128x128xbf16>, vector<2x128xf32> -> vector<2x128xf32>
      %c0_72 = arith.constant 0 : index
      %c0_73 = arith.constant 0 : index
      %149 = vector.load %arg19[%c0_72, %c0_73] : memref<1x128xf32, #tpu.memory_space<vmem>>, vector<1x128xf32>
      %150 = vector.broadcast %149 : vector<1x128xf32> to vector<2x128xf32>
      %151 = arith.addf %148, %150 : vector<2x128xf32>
      %c0_74 = arith.constant 0 : index
      %c0_75 = arith.constant 0 : index
      %152 = vector.load %arg20[%c0_74, %c0_75] : memref<2x128xf32, #tpu.memory_space<vmem>>, vector<2x128xf32>
      tpu.vector_store %arg20[%c0_74, %c0_75], %151 {strides = array<i32>} : memref<2x128xf32, #tpu.memory_space<vmem>>, vector<2x128xf32>,
    } else {
    }
    return
  }
  func.func @transform_0(%arg0: i32) -> (i32, i32) {
    %c0_i32 = arith.constant 0 : i32
    %c0_i32_0 = arith.constant 0 : i32
    %c0_i32_1 = arith.constant 0 : i32
    return %c0_i32, %c0_i32_0 : i32, i32
  }
  func.func @transform_1(%arg0: i32) -> (i32, i32) {
    %c0_i32 = arith.constant 0 : i32
    %c0_i32_0 = arith.constant 0 : i32
    %c0_i32_1 = arith.constant 0 : i32
    return %c0_i32, %c0_i32_0 : i32, i32
  }
  func.func @transform_2(%arg0: i32) -> (i32, i32) {
    %c0_i32 = arith.constant 0 : i32
    %c0_i32_0 = arith.constant 0 : i32
    %c0_i32_1 = arith.constant 0 : i32
    return %c0_i32, %c0_i32_0 : i32, i32
  }
  func.func @transform_3(%arg0: i32) -> (i32, i32) {
    %c0_i32 = arith.constant 0 : i32
    %c0_i32_0 = arith.constant 0 : i32
    %c0_i32_1 = arith.constant 0 : i32
    return %c0_i32, %c0_i32_0 : i32, i32
  }
  func.func @transform_4(%arg0: i32) -> (i32, i32, i32) {
    %c0_i32 = arith.constant 0 : i32
    %c0_i32_0 = arith.constant 0 : i32
    %c0_i32_1 = arith.constant 0 : i32
    return %arg0, %c0_i32, %c0_i32_0 : i32, i32, i32
  }
  func.func @transform_5(%arg0: i32) -> (i32, i32, i32) {
    %c0_i32 = arith.constant 0 : i32
    %c0_i32_0 = arith.constant 0 : i32
    %c0_i32_1 = arith.constant 0 : i32
    return %arg0, %c0_i32, %c0_i32_0 : i32, i32, i32
  }
  func.func @transform_6(%arg0: i32) -> (i32, i32, i32) {
    %c0_i32 = arith.constant 0 : i32
    %c0_i32_0 = arith.constant 0 : i32
    %c0_i32_1 = arith.constant 0 : i32
    return %arg0, %c0_i32, %c0_i32_0 : i32, i32, i32
  }
  func.func @transform_7(%arg0: i32) -> (i32, i32, i32) {
    %c0_i32 = arith.constant 0 : i32
    %c0_i32_0 = arith.constant 0 : i32
    %c0_i32_1 = arith.constant 0 : i32
    return %arg0, %c0_i32, %c0_i32_0 : i32, i32, i32
  }
  func.func @transform_8(%arg0: i32) -> (i32, i32, i32) {
    %c0_i32 = arith.constant 0 : i32
    %c0_i32_0 = arith.constant 0 : i32
    %c0_i32_1 = arith.constant 0 : i32
    return %arg0, %c0_i32, %c0_i32_0 : i32, i32, i32
  }
  func.func @transform_9(%arg0: i32) -> (i32, i32, i32) {
    %c0_i32 = arith.constant 0 : i32
    %c0_i32_0 = arith.constant 0 : i32
    %c0_i32_1 = arith.constant 0 : i32
    return %arg0, %c0_i32, %c0_i32_0 : i32, i32, i32
  }
  func.func @transform_10(%arg0: i32) -> (i32, i32, i32) {
    %c0_i32 = arith.constant 0 : i32
    %c0_i32_0 = arith.constant 0 : i32
    %c0_i32_1 = arith.constant 0 : i32
    return %arg0, %c0_i32, %c0_i32_0 : i32, i32, i32
  }
  func.func @transform_11(%arg0: i32) -> (i32, i32, i32) {
    %c0_i32 = arith.constant 0 : i32
    %c0_i32_0 = arith.constant 0 : i32
    %c0_i32_1 = arith.constant 0 : i32
    return %arg0, %c0_i32, %c0_i32_0 : i32, i32, i32
  }
  func.func @transform_12(%arg0: i32) -> (i32, i32, i32) {
    %c0_i32 = arith.constant 0 : i32
    %c0_i32_0 = arith.constant 0 : i32
    %c0_i32_1 = arith.constant 0 : i32
    return %arg0, %c0_i32, %c0_i32_0 : i32, i32, i32
  }
  func.func @transform_13(%arg0: i32) -> (i32, i32, i32) {
    %c0_i32 = arith.constant 0 : i32
    %c0_i32_0 = arith.constant 0 : i32
    %c0_i32_1 = arith.constant 0 : i32
    return %arg0, %c0_i32, %c0_i32_0 : i32, i32, i32
  }
  func.func @transform_14(%arg0: i32) -> (i32, i32, i32) {
    %c0_i32 = arith.constant 0 : i32
    %c0_i32_0 = arith.constant 0 : i32
    %c0_i32_1 = arith.constant 0 : i32
    return %arg0, %c0_i32, %c0_i32_0 : i32, i32, i32
  }
  func.func @transform_15(%arg0: i32) -> (i32, i32) {
    %c0_i32 = arith.constant 0 : i32
    %c0_i32_0 = arith.constant 0 : i32
    %c0_i32_1 = arith.constant 0 : i32
    return %c0_i32, %c0_i32_0 : i32, i32
  }
  func.func @transform_16(%arg0: i32) -> (i32, i32) {
    %c0_i32 = arith.constant 0 : i32
    %c0_i32_0 = arith.constant 0 : i32
    %c0_i32_1 = arith.constant 0 : i32
    return %c0_i32, %c0_i32_0 : i32, i32
  }
  func.func @transform_17(%arg0: i32) -> (i32, i32) {
    %c0_i32 = arith.constant 0 : i32
    %c0_i32_0 = arith.constant 0 : i32
    %c0_i32_1 = arith.constant 0 : i32
    return %c0_i32, %c0_i32_0 : i32, i32
  }
  func.func @transform_18(%arg0: i32) -> (i32, i32) {
    %c0_i32 = arith.constant 0 : i32
    %c0_i32_0 = arith.constant 0 : i32
    %c0_i32_1 = arith.constant 0 : i32
    return %c0_i32, %c0_i32_0 : i32, i32
  }
  func.func @transform_19(%arg0: i32) -> (i32, i32) {
    %c0_i32 = arith.constant 0 : i32
    %c0_i32_0 = arith.constant 0 : i32
    %c0_i32_1 = arith.constant 0 : i32
    return %c0_i32, %c0_i32_0 : i32, i32
  }
}

</mosaic_0001>

<llo_original>
// kernel: disaster_net_forward.1
$region0: #{disaster_net_forward.1}
  #allocation0 [shape = 'u32[]', space=smem, size = 0x4, offset = 0x4, fixed_abs, tag = 'smem constant byte address 0x4 - core index']
  #allocation1 [shape = 'u32[144,128]{1,0:T(1,128)}', space=vmem, size = 0x12000, scoped, tag = 'internal scratch']
  #allocation2 [shape = 'f32[16,128]{1,0:T(8,128)}', space=vmem, size = 0x2000, scoped, tag = 'scratch operand']
  %s0 = inlined_call_operand.vmem [shape: f32[16,128], index: 0, kind: input, shape index: {}]
  %s1 = inlined_call_operand.vmem [shape: f32[16,16], index: 1, kind: input, shape index: {}]
  %s2 = inlined_call_operand.vmem [shape: f32[1,128], index: 2, kind: input, shape index: {}]
  %s3 = inlined_call_operand.vmem [shape: f32[1,128], index: 3, kind: input, shape index: {}]
  %s4 = inlined_call_operand.hbm [shape: bf16[2,128,768], index: 4, kind: input, shape index: {}]
  %s5 = inlined_call_operand.vmem [shape: f32[2,1,768], index: 5, kind: input, shape index: {}]
  %s6 = inlined_call_operand.vmem [shape: f32[2,1,128], index: 6, kind: input, shape index: {}]
  %s7 = inlined_call_operand.vmem [shape: f32[2,1,128], index: 7, kind: input, shape index: {}]
  %s8 = inlined_call_operand.vmem [shape: f32[2,1,128], index: 8, kind: input, shape index: {}]
  %s9 = inlined_call_operand.hbm [shape: bf16[2,128,512], index: 9, kind: input, shape index: {}]
  %s10 = inlined_call_operand.vmem [shape: f32[2,1,512], index: 10, kind: input, shape index: {}]
  %s11 = inlined_call_operand.hbm [shape: bf16[2,512,128], index: 11, kind: input, shape index: {}]
  %s12 = inlined_call_operand.vmem [shape: f32[2,1,128], index: 12, kind: input, shape index: {}]
  %s13 = inlined_call_operand.vmem [shape: f32[2,1,128], index: 13, kind: input, shape index: {}]
  %s14 = inlined_call_operand.vmem [shape: f32[2,1,128], index: 14, kind: input, shape index: {}]
  %s15 = inlined_call_operand.vmem [shape: bf16[128,128], index: 15, kind: input, shape index: {}]
  %s16 = inlined_call_operand.vmem [shape: f32[1,128], index: 16, kind: input, shape index: {}]
  %s17 = inlined_call_operand.vmem [shape: bf16[128,128], index: 17, kind: input, shape index: {}]
  %s18 = inlined_call_operand.vmem [shape: f32[1,128], index: 18, kind: input, shape index: {}]
  %s19 = inlined_call_operand.hbm [shape: f32[2,128], index: 19, kind: output, shape index: {}]
  %s20 = sld [smem:[#allocation0]]
  $region129: #{disaster_net_forward.1} parent=0
    _
  %s22 = ssub.s32 1, %s20
  %s23 = scalar_select 0, %s22, %s20
  $region1: #{disaster_net_forward.1} parent=0
    #allocation3 [shape = 'u8[393216]{0}', space=vmem, size = 0x60000, scoped, tag = 'input window, operand 4']
    #allocation4 [shape = 's32[2]{0}', space=sflag, size = 0x8, scoped, tag = 'scoped memory for disaster_net_forward.1']
    #allocation5 [shape = 's32[2]{0}', space=sflag, size = 0x8, scoped, tag = 'scoped memory for disaster_net_forward.1']
    #allocation6 [shape = 'u8[262144]{0}', space=vmem, size = 0x40000, scoped, tag = 'input window, operand 9']
    #allocation7 [shape = 's32[2]{0}', space=sflag, size = 0x8, scoped, tag = 'scoped memory for disaster_net_forward.1']
    #allocation8 [shape = 'u8[262144]{0}', space=vmem, size = 0x40000, scoped, tag = 'input window, operand 11']
    #allocation9 [shape = 'u8[1024]{0}', space=vmem, size = 0x400, scoped, tag = 'output window, operand 0, single buffered']
    %24 = vsyncpa [#allocation4], 0
    %s25 = scalar_lea.sflag [#allocation4], 1
    %26 = vsyncpa %s25, 0
    %27 = vsyncpa [#allocation7], 0
    %s28 = scalar_lea.sflag [#allocation7], 1
    %29 = vsyncpa %s28, 0
    %30 = vsyncpa [#allocation5], 0
    loop: start=0, step=1, limit=4
    $region2: #{disaster_net_forward.1} parent=1 // loop_pre_header
      _
    $region3: #{disaster_net_forward.1} parent=1 // loop_header
      %s32 = sphi 0, %s36
      %p33 = scmp.ge.s32.totalorder %s32, 4
      %s40 = sphi 0, %s40
      %s42 = sphi 0, %s40
      %s43 = sphi 0, %s42
      %s57 = sphi 0, %s43
      %s61 = sphi 0, %s61
      %s63 = sphi 0, %s61
      %s64 = sphi 0, %s63
      %s78 = sphi 0, %s64
      %s82 = sphi 0, %s82
      %s84 = sphi 0, %s82
      %s85 = sphi 0, %s84
      %s99 = sphi 0, %s85
      %s103 = sphi 0, %s103
      %s105 = sphi 0, %s103
      %s106 = sphi 0, %s105
      %s120 = sphi 0, %s106
      %s126 = sphi 0, %s128
      %s129 = sphi 0, %s126
      %s130 = sphi 0, %s129
      %s146 = sphi 0, %s130
      %s152 = sphi 0, %s154
      %s155 = sphi 0, %s152
      %s156 = sphi 0, %s155
      %s172 = sphi 0, %s156
      %s178 = sphi 0, %s180
      %s181 = sphi 0, %s178
      %s182 = sphi 0, %s181
      %s198 = sphi 0, %s182
      %s204 = sphi 0, %s206
      %s207 = sphi 0, %s204
      %s208 = sphi 0, %s207
      %s224 = sphi 0, %s208
      %s230 = sphi 0, %s232
      %s233 = sphi 0, %s230
      %s234 = sphi 0, %s233
      %s250 = sphi 0, %s234
      %s256 = sphi 0, %s258
      %s259 = sphi 0, %s256
      %s260 = sphi 0, %s259
      %s276 = sphi 0, %s260
      %s282 = sphi 0, %s284
      %s285 = sphi 0, %s282
      %s286 = sphi 0, %s285
      %s302 = sphi 0, %s286
      %s308 = sphi 0, %s310
      %s311 = sphi 0, %s308
      %s312 = sphi 0, %s311
      %s328 = sphi 0, %s312
      %s334 = sphi 0, %s336
      %s337 = sphi 0, %s334
      %s338 = sphi 0, %s337
      %s354 = sphi 0, %s338
      %s360 = sphi 0, %s362
      %s363 = sphi 0, %s360
      %s364 = sphi 0, %s363
      %s380 = sphi 0, %s364
      %s386 = sphi 0, %s388
      %s389 = sphi 0, %s386
      %s390 = sphi 0, %s389
      %s406 = sphi 0, %s390
      %s410 = sphi 0, %s410
      %s412 = sphi 0, %s410
      %s413 = sphi 0, %s412
      %s427 = sphi 0, %s413
      %s431 = sphi 0, %s431
      %s433 = sphi 0, %s431
      %s434 = sphi 0, %s433
      %s448 = sphi 0, %s434
      %s452 = sphi 0, %s452
      %s454 = sphi 0, %s452
      %s455 = sphi 0, %s454
      %s469 = sphi 0, %s455
      %s473 = sphi 0, %s473
      %s475 = sphi 0, %s473
      %s476 = sphi 0, %s475
      %s490 = sphi 0, %s476
      %s494 = sphi 0, %s494
      %s496 = sphi 0, %s494
      %s497 = sphi 0, %s496
      %s511 = sphi 0, %s497
    $region4: #{disaster_net_forward.1} parent=1 // loop_header_branch
      %35 = sbr.rel (%p33) target = $region8
    $region5: #{disaster_net_forward.1} parent=1 // loop_body
      %s37 = ssub.s32 %s32, 1
      %s38 = ssub.s32 %s32, 2
      %s39 = sadd.s32 %s32, 1
      %s41 = sadd.s32 %s40, 1
      %p44 = scmp.eq.s32.totalorder %s32, 1
      %p45 = scmp.ne.s32.totalorder %s40, %s42
      %p46 = scmp.eq.s32.totalorder %s32, 0
      %p47 = por %p45, %p46
      %p48 = scmp.ne.s32.totalorder %s40, %s42
      %p49 = scmp.eq.s32.totalorder %s37, 1
      %p50 = por %p48, %p49
      %p51 = scmp.ne.s32.totalorder %s42, %s43
      %p52 = scmp.eq.s32.totalorder %s37, 0
      %p53 = por %p51, %p52
      %p54 = scmp.ne.s32.totalorder %s42, %s43
      %p55 = scmp.eq.s32.totalorder %s38, 1
      %p56 = por %p54, %p55
      %p58 = scmp.ne.s32.totalorder %s43, %s57
      %p59 = scmp.eq.s32.totalorder %s38, 0
      %p60 = por %p58, %p59
      %s62 = sadd.s32 %s61, 1
      %p65 = scmp.eq.s32.totalorder %s32, 1
      %p66 = scmp.ne.s32.totalorder %s61, %s63
      %p67 = scmp.eq.s32.totalorder %s32, 0
      %p68 = por %p66, %p67
      %p69 = scmp.ne.s32.totalorder %s61, %s63
      %p70 = scmp.eq.s32.totalorder %s37, 1
      %p71 = por %p69, %p70
      %p72 = scmp.ne.s32.totalorder %s63, %s64
      %p73 = scmp.eq.s32.totalorder %s37, 0
      %p74 = por %p72, %p73
      %p75 = scmp.ne.s32.totalorder %s63, %s64
      %p76 = scmp.eq.s32.totalorder %s38, 1
      %p77 = por %p75, %p76
      %p79 = scmp.ne.s32.totalorder %s64, %s78
      %p80 = scmp.eq.s32.totalorder %s38, 0
      %p81 = por %p79, %p80
      %s83 = sadd.s32 %s82, 1
      %p86 = scmp.eq.s32.totalorder %s32, 1
      %p87 = scmp.ne.s32.totalorder %s82, %s84
      %p88 = scmp.eq.s32.totalorder %s32, 0
      %p89 = por %p87, %p88
      %p90 = scmp.ne.s32.totalorder %s82, %s84
      %p91 = scmp.eq.s32.totalorder %s37, 1
      %p92 = por %p90, %p91
      %p93 = scmp.ne.s32.totalorder %s84, %s85
      %p94 = scmp.eq.s32.totalorder %s37, 0
      %p95 = por %p93, %p94
      %p96 = scmp.ne.s32.totalorder %s84, %s85
      %p97 = scmp.eq.s32.totalorder %s38, 1
      %p98 = por %p96, %p97
      %p100 = scmp.ne.s32.totalorder %s85, %s99
      %p101 = scmp.eq.s32.totalorder %s38, 0
      %p102 = por %p100, %p101
      %s104 = sadd.s32 %s103, 1
      %p107 = scmp.eq.s32.totalorder %s32, 1
      %p108 = scmp.ne.s32.totalorder %s103, %s105
      %p109 = scmp.eq.s32.totalorder %s32, 0
      %p110 = por %p108, %p109
      %p111 = scmp.ne.s32.totalorder %s103, %s105
      %p112 = scmp.eq.s32.totalorder %s37, 1
      %p113 = por %p111, %p112
      %p114 = scmp.ne.s32.totalorder %s105, %s106
      %p115 = scmp.eq.s32.totalorder %s37, 0
      %p116 = por %p114, %p115
      %p117 = scmp.ne.s32.totalorder %s105, %s106
      %p118 = scmp.eq.s32.totalorder %s38, 1
      %p119 = por %p117, %p118
      %p121 = scmp.ne.s32.totalorder %s106, %s120
      %p122 = scmp.eq.s32.totalorder %s38, 0
      %p123 = por %p121, %p122
      %s124 = ssub.s32 %s32, %s39
      %p125 = scmp.eq.s32.totalorder %s124, 0
      %s127 = sadd.s32 %s126, 1
      %s128 = scalar_select %p125, %s126, %s127
      %p131 = pneg %p125
      %p132 = scmp.eq.s32.totalorder %s32, 1
      %p133 = por %p131, %p132
      %p134 = scmp.ne.s32.totalorder %s126, %s129
      %p135 = scmp.eq.s32.totalorder %s32, 0
      %p136 = por %p134, %p135
      %p137 = scmp.ne.s32.totalorder %s126, %s129
      %p138 = scmp.eq.s32.totalorder %s37, 1
      %p139 = por %p137, %p138
      %p140 = scmp.ne.s32.totalorder %s129, %s130
      %p141 = scmp.eq.s32.totalorder %s37, 0
      %p142 = por %p140, %p141
      %p143 = scmp.ne.s32.totalorder %s129, %s130
      %p144 = scmp.eq.s32.totalorder %s38, 1
      %p145 = por %p143, %p144
      %p147 = scmp.ne.s32.totalorder %s130, %s146
      %p148 = scmp.eq.s32.totalorder %s38, 0
      %p149 = por %p147, %p148
      %s150 = ssub.s32 %s32, %s39
      %p151 = scmp.eq.s32.totalorder %s150, 0
      %s153 = sadd.s32 %s152, 1
      %s154 = scalar_select %p151, %s152, %s153
      %p157 = pneg %p151
      %p158 = scmp.eq.s32.totalorder %s32, 1
      %p159 = por %p157, %p158
      %p160 = scmp.ne.s32.totalorder %s152, %s155
      %p161 = scmp.eq.s32.totalorder %s32, 0
      %p162 = por %p160, %p161
      %p163 = scmp.ne.s32.totalorder %s152, %s155
      %p164 = scmp.eq.s32.totalorder %s37, 1
      %p165 = por %p163, %p164
      %p166 = scmp.ne.s32.totalorder %s155, %s156
      %p167 = scmp.eq.s32.totalorder %s37, 0
      %p168 = por %p166, %p167
      %p169 = scmp.ne.s32.totalorder %s155, %s156
      %p170 = scmp.eq.s32.totalorder %s38, 1
      %p171 = por %p169, %p170
      %p173 = scmp.ne.s32.totalorder %s156, %s172
      %p174 = scmp.eq.s32.totalorder %s38, 0
      %p175 = por %p173, %p174
      %s176 = ssub.s32 %s32, %s39
      %p177 = scmp.eq.s32.totalorder %s176, 0
      %s179 = sadd.s32 %s178, 1
      %s180 = scalar_select %p177, %s178, %s179
      %p183 = pneg %p177
      %p184 = scmp.eq.s32.totalorder %s32, 1
      %p185 = por %p183, %p184
      %p186 = scmp.ne.s32.totalorder %s178, %s181
      %p187 = scmp.eq.s32.totalorder %s32, 0
      %p188 = por %p186, %p187
      %p189 = scmp.ne.s32.totalorder %s178, %s181
      %p190 = scmp.eq.s32.totalorder %s37, 1
      %p191 = por %p189, %p190
      %p192 = scmp.ne.s32.totalorder %s181, %s182
      %p193 = scmp.eq.s32.totalorder %s37, 0
      %p194 = por %p192, %p193
      %p195 = scmp.ne.s32.totalorder %s181, %s182
      %p196 = scmp.eq.s32.totalorder %s38, 1
      %p197 = por %p195, %p196
      %p199 = scmp.ne.s32.totalorder %s182, %s198
      %p200 = scmp.eq.s32.totalorder %s38, 0
      %p201 = por %p199, %p200
      %s202 = ssub.s32 %s32, %s39
      %p203 = scmp.eq.s32.totalorder %s202, 0
      %s205 = sadd.s32 %s204, 1
      %s206 = scalar_select %p203, %s204, %s205
      %p209 = pneg %p203
      %p210 = scmp.eq.s32.totalorder %s32, 1
      %p211 = por %p209, %p210
      %p212 = scmp.ne.s32.totalorder %s204, %s207
      %p213 = scmp.eq.s32.totalorder %s32, 0
      %p214 = por %p212, %p213
      %p215 = scmp.ne.s32.totalorder %s204, %s207
      %p216 = scmp.eq.s32.totalorder %s37, 1
      %p217 = por %p215, %p216
      %p218 = scmp.ne.s32.totalorder %s207, %s208
      %p219 = scmp.eq.s32.totalorder %s37, 0
      %p220 = por %p218, %p219
      %p221 = scmp.ne.s32.totalorder %s207, %s208
      %p222 = scmp.eq.s32.totalorder %s38, 1
      %p223 = por %p221, %p222
      %p225 = scmp.ne.s32.totalorder %s208, %s224
      %p226 = scmp.eq.s32.totalorder %s38, 0
      %p227 = por %p225, %p226
      %s228 = ssub.s32 %s32, %s39
      %p229 = scmp.eq.s32.totalorder %s228, 0
      %s231 = sadd.s32 %s230, 1
      %s232 = scalar_select %p229, %s230, %s231
      %p235 = pneg %p229
      %p236 = scmp.eq.s32.totalorder %s32, 1
      %p237 = por %p235, %p236
      %p238 = scmp.ne.s32.totalorder %s230, %s233
      %p239 = scmp.eq.s32.totalorder %s32, 0
      %p240 = por %p238, %p239
      %p241 = scmp.ne.s32.totalorder %s230, %s233
      %p242 = scmp.eq.s32.totalorder %s37, 1
      %p243 = por %p241, %p242
      %p244 = scmp.ne.s32.totalorder %s233, %s234
      %p245 = scmp.eq.s32.totalorder %s37, 0
      %p246 = por %p244, %p245
      %p247 = scmp.ne.s32.totalorder %s233, %s234
      %p248 = scmp.eq.s32.totalorder %s38, 1
      %p249 = por %p247, %p248
      %p251 = scmp.ne.s32.totalorder %s234, %s250
      %p252 = scmp.eq.s32.totalorder %s38, 0
      %p253 = por %p251, %p252
      %s254 = ssub.s32 %s32, %s39
      %p255 = scmp.eq.s32.totalorder %s254, 0
      %s257 = sadd.s32 %s256, 1
      %s258 = scalar_select %p255, %s256, %s257
      %p261 = pneg %p255
      %p262 = scmp.eq.s32.totalorder %s32, 1
      %p263 = por %p261, %p262
      %p264 = scmp.ne.s32.totalorder %s256, %s259
      %p265 = scmp.eq.s32.totalorder %s32, 0
      %p266 = por %p264, %p265
      %p267 = scmp.ne.s32.totalorder %s256, %s259
      %p268 = scmp.eq.s32.totalorder %s37, 1
      %p269 = por %p267, %p268
      %p270 = scmp.ne.s32.totalorder %s259, %s260
      %p271 = scmp.eq.s32.totalorder %s37, 0
      %p272 = por %p270, %p271
      %p273 = scmp.ne.s32.totalorder %s259, %s260
      %p274 = scmp.eq.s32.totalorder %s38, 1
      %p275 = por %p273, %p274
      %p277 = scmp.ne.s32.totalorder %s260, %s276
      %p278 = scmp.eq.s32.totalorder %s38, 0
      %p279 = por %p277, %p278
      %s280 = ssub.s32 %s32, %s39
      %p281 = scmp.eq.s32.totalorder %s280, 0
      %s283 = sadd.s32 %s282, 1
      %s284 = scalar_select %p281, %s282, %s283
      %p287 = pneg %p281
      %p288 = scmp.eq.s32.totalorder %s32, 1
      %p289 = por %p287, %p288
      %p290 = scmp.ne.s32.totalorder %s282, %s285
      %p291 = scmp.eq.s32.totalorder %s32, 0
      %p292 = por %p290, %p291
      %p293 = scmp.ne.s32.totalorder %s282, %s285
      %p294 = scmp.eq.s32.totalorder %s37, 1
      %p295 = por %p293, %p294
      %p296 = scmp.ne.s32.totalorder %s285, %s286
      %p297 = scmp.eq.s32.totalorder %s37, 0
      %p298 = por %p296, %p297
      %p299 = scmp.ne.s32.totalorder %s285, %s286
      %p300 = scmp.eq.s32.totalorder %s38, 1
      %p301 = por %p299, %p300
      %p303 = scmp.ne.s32.totalorder %s286, %s302
      %p304 = scmp.eq.s32.totalorder %s38, 0
      %p305 = por %p303, %p304
      %s306 = ssub.s32 %s32, %s39
      %p307 = scmp.eq.s32.totalorder %s306, 0
      %s309 = sadd.s32 %s308, 1
      %s310 = scalar_select %p307, %s308, %s309
      %p313 = pneg %p307
      %p314 = scmp.eq.s32.totalorder %s32, 1
      %p315 = por %p313, %p314
      %p316 = scmp.ne.s32.totalorder %s308, %s311
      %p317 = scmp.eq.s32.totalorder %s32, 0
      %p318 = por %p316, %p317
      %p319 = scmp.ne.s32.totalorder %s308, %s311
      %p320 = scmp.eq.s32.totalorder %s37, 1
      %p321 = por %p319, %p320
      %p322 = scmp.ne.s32.totalorder %s311, %s312
      %p323 = scmp.eq.s32.totalorder %s37, 0
      %p324 = por %p322, %p323
      %p325 = scmp.ne.s32.totalorder %s311, %s312
      %p326 = scmp.eq.s32.totalorder %s38, 1
      %p327 = por %p325, %p326
      %p329 = scmp.ne.s32.totalorder %s312, %s328
      %p330 = scmp.eq.s32.totalorder %s38, 0
      %p331 = por %p329, %p330
      %s332 = ssub.s32 %s32, %s39
      %p333 = scmp.eq.s32.totalorder %s332, 0
      %s335 = sadd.s32 %s334, 1
      %s336 = scalar_select %p333, %s334, %s335
      %p339 = pneg %p333
      %p340 = scmp.eq.s32.totalorder %s32, 1
      %p341 = por %p339, %p340
      %p342 = scmp.ne.s32.totalorder %s334, %s337
      %p343 = scmp.eq.s32.totalorder %s32, 0
      %p344 = por %p342, %p343
      %p345 = scmp.ne.s32.totalorder %s334, %s337
      %p346 = scmp.eq.s32.totalorder %s37, 1
      %p347 = por %p345, %p346
      %p348 = scmp.ne.s32.totalorder %s337, %s338
      %p349 = scmp.eq.s32.totalorder %s37, 0
      %p350 = por %p348, %p349
      %p351 = scmp.ne.s32.totalorder %s337, %s338
      %p352 = scmp.eq.s32.totalorder %s38, 1
      %p353 = por %p351, %p352
      %p355 = scmp.ne.s32.totalorder %s338, %s354
      %p356 = scmp.eq.s32.totalorder %s38, 0
      %p357 = por %p355, %p356
      %s358 = ssub.s32 %s32, %s39
      %p359 = scmp.eq.s32.totalorder %s358, 0
      %s361 = sadd.s32 %s360, 1
      %s362 = scalar_select %p359, %s360, %s361
      %p365 = pneg %p359
      %p366 = scmp.eq.s32.totalorder %s32, 1
      %p367 = por %p365, %p366
      %p368 = scmp.ne.s32.totalorder %s360, %s363
      %p369 = scmp.eq.s32.totalorder %s32, 0
      %p370 = por %p368, %p369
      %p371 = scmp.ne.s32.totalorder %s360, %s363
      %p372 = scmp.eq.s32.totalorder %s37, 1
      %p373 = por %p371, %p372
      %p374 = scmp.ne.s32.totalorder %s363, %s364
      %p375 = scmp.eq.s32.totalorder %s37, 0
      %p376 = por %p374, %p375
      %p377 = scmp.ne.s32.totalorder %s363, %s364
      %p378 = scmp.eq.s32.totalorder %s38, 1
      %p379 = por %p377, %p378
      %p381 = scmp.ne.s32.totalorder %s364, %s380
      %p382 = scmp.eq.s32.totalorder %s38, 0
      %p383 = por %p381, %p382
      %s384 = ssub.s32 %s32, %s39
      %p385 = scmp.eq.s32.totalorder %s384, 0
      %s387 = sadd.s32 %s386, 1
      %s388 = scalar_select %p385, %s386, %s387
      %p391 = pneg %p385
      %p392 = scmp.eq.s32.totalorder %s32, 1
      %p393 = por %p391, %p392
      %p394 = scmp.ne.s32.totalorder %s386, %s389
      %p395 = scmp.eq.s32.totalorder %s32, 0
      %p396 = por %p394, %p395
      %p397 = scmp.ne.s32.totalorder %s386, %s389
      %p398 = scmp.eq.s32.totalorder %s37, 1
      %p399 = por %p397, %p398
      %p400 = scmp.ne.s32.totalorder %s389, %s390
      %p401 = scmp.eq.s32.totalorder %s37, 0
      %p402 = por %p400, %p401
      %p403 = scmp.ne.s32.totalorder %s389, %s390
      %p404 = scmp.eq.s32.totalorder %s38, 1
      %p405 = por %p403, %p404
      %p407 = scmp.ne.s32.totalorder %s390, %s406
      %p408 = scmp.eq.s32.totalorder %s38, 0
      %p409 = por %p407, %p408
      %s411 = sadd.s32 %s410, 1
      %p414 = scmp.eq.s32.totalorder %s32, 1
      %p415 = scmp.ne.s32.totalorder %s410, %s412
      %p416 = scmp.eq.s32.totalorder %s32, 0
      %p417 = por %p415, %p416
      %p418 = scmp.ne.s32.totalorder %s410, %s412
      %p419 = scmp.eq.s32.totalorder %s37, 1
      %p420 = por %p418, %p419
      %p421 = scmp.ne.s32.totalorder %s412, %s413
      %p422 = scmp.eq.s32.totalorder %s37, 0
      %p423 = por %p421, %p422
      %p424 = scmp.ne.s32.totalorder %s412, %s413
      %p425 = scmp.eq.s32.totalorder %s38, 1
      %p426 = por %p424, %p425
      %p428 = scmp.ne.s32.totalorder %s413, %s427
      %p429 = scmp.eq.s32.totalorder %s38, 0
      %p430 = por %p428, %p429
      %s432 = sadd.s32 %s431, 1
      %p435 = scmp.eq.s32.totalorder %s32, 1
      %p436 = scmp.ne.s32.totalorder %s431, %s433
      %p437 = scmp.eq.s32.totalorder %s32, 0
      %p438 = por %p436, %p437
      %p439 = scmp.ne.s32.totalorder %s431, %s433
      %p440 = scmp.eq.s32.totalorder %s37, 1
      %p441 = por %p439, %p440
      %p442 = scmp.ne.s32.totalorder %s433, %s434
      %p443 = scmp.eq.s32.totalorder %s37, 0
      %p444 = por %p442, %p443
      %p445 = scmp.ne.s32.totalorder %s433, %s434
      %p446 = scmp.eq.s32.totalorder %s38, 1
      %p447 = por %p445, %p446
      %p449 = scmp.ne.s32.totalorder %s434, %s448
      %p450 = scmp.eq.s32.totalorder %s38, 0
      %p451 = por %p449, %p450
      %s453 = sadd.s32 %s452, 1
      %p456 = scmp.eq.s32.totalorder %s32, 1
      %p457 = scmp.ne.s32.totalorder %s452, %s454
      %p458 = scmp.eq.s32.totalorder %s32, 0
      %p459 = por %p457, %p458
      %p460 = scmp.ne.s32.totalorder %s452, %s454
      %p461 = scmp.eq.s32.totalorder %s37, 1
      %p462 = por %p460, %p461
      %p463 = scmp.ne.s32.totalorder %s454, %s455
      %p464 = scmp.eq.s32.totalorder %s37, 0
      %p465 = por %p463, %p464
      %p466 = scmp.ne.s32.totalorder %s454, %s455
      %p467 = scmp.eq.s32.totalorder %s38, 1
      %p468 = por %p466, %p467
      %p470 = scmp.ne.s32.totalorder %s455, %s469
      %p471 = scmp.eq.s32.totalorder %s38, 0
      %p472 = por %p470, %p471
      %s474 = sadd.s32 %s473, 1
      %p477 = scmp.eq.s32.totalorder %s32, 1
      %p478 = scmp.ne.s32.totalorder %s473, %s475
      %p479 = scmp.eq.s32.totalorder %s32, 0
      %p480 = por %p478, %p479
      %p481 = scmp.ne.s32.totalorder %s473, %s475
      %p482 = scmp.eq.s32.totalorder %s37, 1
      %p483 = por %p481, %p482
      %p484 = scmp.ne.s32.totalorder %s475, %s476
      %p485 = scmp.eq.s32.totalorder %s37, 0
      %p486 = por %p484, %p485
      %p487 = scmp.ne.s32.totalorder %s475, %s476
      %p488 = scmp.eq.s32.totalorder %s38, 1
      %p489 = por %p487, %p488
      %p491 = scmp.ne.s32.totalorder %s476, %s490
      %p492 = scmp.eq.s32.totalorder %s38, 0
      %p493 = por %p491, %p492
      %s495 = sadd.s32 %s494, 1
      %p498 = scmp.eq.s32.totalorder %s32, 1
      %p499 = scmp.ne.s32.totalorder %s494, %s496
      %p500 = scmp.eq.s32.totalorder %s32, 0
      %p501 = por %p499, %p500
      %p502 = scmp.ne.s32.totalorder %s494, %s496
      %p503 = scmp.eq.s32.totalorder %s37, 1
      %p504 = por %p502, %p503
      %p505 = scmp.ne.s32.totalorder %s496, %s497
      %p506 = scmp.eq.s32.totalorder %s37, 0
      %p507 = por %p505, %p506
      %p508 = scmp.ne.s32.totalorder %s496, %s497
      %p509 = scmp.eq.s32.totalorder %s38, 1
      %p510 = por %p508, %p509
      %p512 = scmp.ne.s32.totalorder %s497, %s511
      %p513 = scmp.eq.s32.totalorder %s38, 0
      %p514 = por %p512, %p513
      %p515 = scmp.le.s32.totalorder 1, %s32
      %p516 = scmp.lt.s32.totalorder %s32, 3
      %p517 = pnand %p515, %p516
      %p518 = pneg %p517
      // Predicated region
      $region9: #{disaster_net_forward.1} parent=5 // pred_check
        _
      $region10: #{disaster_net_forward.1} parent=5 // pred_check_branch
        %520 = sbr.rel (%p517) target = $region12
      $region11: #{disaster_net_forward.1} parent=5 // pred_region
        %s521 = ssub.s32 %s32, 1
        // Predicated region
        $region13: #{disaster_net_forward.1} parent=11 // pred_check
          %p522 = pneg %p53
        $region14: #{disaster_net_forward.1} parent=11 // pred_check_branch
          %524 = sbr.rel (%p522) target = $region16
        $region15: #{disaster_net_forward.1} parent=11 // pred_region
          _
        $region16: #{disaster_net_forward.1} parent=11 // pred_fallthru
          _
        // Predicated region
        $region17: #{disaster_net_forward.1} parent=11 // pred_check
          %p525 = pneg %p74
        $region18: #{disaster_net_forward.1} parent=11 // pred_check_branch
          %527 = sbr.rel (%p525) target = $region20
        $region19: #{disaster_net_forward.1} parent=11 // pred_region
          _
        $region20: #{disaster_net_forward.1} parent=11 // pred_fallthru
          _
        // Predicated region
        $region21: #{disaster_net_forward.1} parent=11 // pred_check
          %p528 = pneg %p95
        $region22: #{disaster_net_forward.1} parent=11 // pred_check_branch
          %530 = sbr.rel (%p528) target = $region24
        $region23: #{disaster_net_forward.1} parent=11 // pred_region
          _
        $region24: #{disaster_net_forward.1} parent=11 // pred_fallthru
          _
        // Predicated region
        $region25: #{disaster_net_forward.1} parent=11 // pred_check
          %p531 = pneg %p116
        $region26: #{disaster_net_forward.1} parent=11 // pred_check_branch
          %533 = sbr.rel (%p531) target = $region28
        $region27: #{disaster_net_forward.1} parent=11 // pred_region
          _
        $region28: #{disaster_net_forward.1} parent=11 // pred_fallthru
          _
        // Predicated region
        $region29: #{disaster_net_forward.1} parent=11 // pred_check
          %p534 = pneg %p423
        $region30: #{disaster_net_forward.1} parent=11 // pred_check_branch
          %536 = sbr.rel (%p534) target = $region32
        $region31: #{disaster_net_forward.1} parent=11 // pred_region
          _
        $region32: #{disaster_net_forward.1} parent=11 // pred_fallthru
          _
        // Predicated region
        $region33: #{disaster_net_forward.1} parent=11 // pred_check
          %p537 = pneg %p444
        $region34: #{disaster_net_forward.1} parent=11 // pred_check_branch
          %539 = sbr.rel (%p537) target = $region36
        $region35: #{disaster_net_forward.1} parent=11 // pred_region
          _
        $region36: #{disaster_net_forward.1} parent=11 // pred_fallthru
          _
        // Predicated region
        $region37: #{disaster_net_forward.1} parent=11 // pred_check
          %p540 = pneg %p465
        $region38: #{disaster_net_forward.1} parent=11 // pred_check_branch
          %542 = sbr.rel (%p540) target = $region40
        $region39: #{disaster_net_forward.1} parent=11 // pred_region
          _
        $region40: #{disaster_net_forward.1} parent=11 // pred_fallthru
          _
        // Predicated region
        $region41: #{disaster_net_forward.1} parent=11 // pred_check
          %p543 = pneg %p486
        $region42: #{disaster_net_forward.1} parent=11 // pred_check_branch
          %545 = sbr.rel (%p543) target = $region44
        $region43: #{disaster_net_forward.1} parent=11 // pred_region
          _
        $region44: #{disaster_net_forward.1} parent=11 // pred_fallthru
          _
      $region12: #{disaster_net_forward.1} parent=5 // pred_fallthru
        _
      %p546 = scmp.lt.s32.totalorder %s32, 2
      // Predicated region
      $region45: #{disaster_net_forward.1} parent=5 // pred_check
        %p547 = pneg %p546
      $region46: #{disaster_net_forward.1} parent=5 // pred_check_branch
        %549 = sbr.rel (%p547) target = $region48
      $region47: #{disaster_net_forward.1} parent=5 // pred_region
        // Predicated region
        $region49: #{disaster_net_forward.1} parent=47 // pred_check
          %p550 = pneg %p136
        $region50: #{disaster_net_forward.1} parent=47 // pred_check_branch
          %552 = sbr.rel (%p550) target = $region52
        $region51: #{disaster_net_forward.1} parent=47 // pred_region
          %s553 = sand.u32 %s126, 1
          %s554 = scalar_lea.sflag [#allocation4], %s553
          %s555 = sand.u32 %s126, 1
          %s556 = smul.addr %s555, 384
          %s557 = scalar_lea.vmem [#allocation3], %s556
          %s559 = ssub.s32 6144, 6144
          %560 = vsyncadd %s554, %s559
          %s561 = smul.addr %s32, 96
          %s562 = smul.addr %s561, 64
          %s563 = scalar_lea.hbm %s4, %s562
          %s564 = sshll.u32 %s557, 4
          %s565 = int_to_ptr.vmem [resolvable:$true] %s564
          %570 = dma.hbm_to_vmem [thread:$0]  %s563, 6144, %s565, %s554, 384, 384, 24
        $region52: #{disaster_net_forward.1} parent=47 // pred_fallthru
          _
        // Predicated region
        $region53: #{disaster_net_forward.1} parent=47 // pred_check
          %p571 = pneg %p162
        $region54: #{disaster_net_forward.1} parent=47 // pred_check_branch
          %573 = sbr.rel (%p571) target = $region56
        $region55: #{disaster_net_forward.1} parent=47 // pred_region
          %p574 = scmp.lt.s32.totalorder %s32, 1
          %s575 = scalar_select %p574, %s32, 1
          %s576 = smul.addr %s575, 6
          %s577 = scalar_lea.vmem %s5, %s576
        $region56: #{disaster_net_forward.1} parent=47 // pred_fallthru
          _
        // Predicated region
        $region57: #{disaster_net_forward.1} parent=47 // pred_check
          %p578 = pneg %p188
        $region58: #{disaster_net_forward.1} parent=47 // pred_check_branch
          %580 = sbr.rel (%p578) target = $region60
        $region59: #{disaster_net_forward.1} parent=47 // pred_region
          %p581 = scmp.lt.s32.totalorder %s32, 1
          %s582 = scalar_select %p581, %s32, 1
          %s583 = scalar_lea.vmem %s6, %s582
        $region60: #{disaster_net_forward.1} parent=47 // pred_fallthru
          _
        // Predicated region
        $region61: #{disaster_net_forward.1} parent=47 // pred_check
          %p584 = pneg %p214
        $region62: #{disaster_net_forward.1} parent=47 // pred_check_branch
          %586 = sbr.rel (%p584) target = $region64
        $region63: #{disaster_net_forward.1} parent=47 // pred_region
          %p587 = scmp.lt.s32.totalorder %s32, 1
          %s588 = scalar_select %p587, %s32, 1
          %s589 = scalar_lea.vmem %s7, %s588
        $region64: #{disaster_net_forward.1} parent=47 // pred_fallthru
          _
        // Predicated region
        $region65: #{disaster_net_forward.1} parent=47 // pred_check
          %p590 = pneg %p240
        $region66: #{disaster_net_forward.1} parent=47 // pred_check_branch
          %592 = sbr.rel (%p590) target = $region68
        $region67: #{disaster_net_forward.1} parent=47 // pred_region
          %p593 = scmp.lt.s32.totalorder %s32, 1
          %s594 = scalar_select %p593, %s32, 1
          %s595 = scalar_lea.vmem %s8, %s594
        $region68: #{disaster_net_forward.1} parent=47 // pred_fallthru
          _
        // Predicated region
        $region69: #{disaster_net_forward.1} parent=47 // pred_check
          %p596 = pneg %p266
        $region70: #{disaster_net_forward.1} parent=47 // pred_check_branch
          %598 = sbr.rel (%p596) target = $region72
        $region71: #{disaster_net_forward.1} parent=47 // pred_region
          %s599 = sand.u32 %s32, 1
          %s600 = scalar_lea.sflag [#allocation7], %s599
          %s601 = sand.u32 %s256, 1
          %s602 = smul.addr %s601, 256
          %s603 = scalar_lea.vmem [#allocation6], %s602
          %s605 = ssub.s32 4096, 4096
          %606 = vsyncadd %s600, %s605
          %s607 = smul.addr %s32, 64
          %s608 = smul.addr %s607, 64
          %s609 = scalar_lea.hbm %s9, %s608
          %s610 = sshll.u32 %s603, 4
          %s611 = int_to_ptr.vmem [resolvable:$true] %s610
          %616 = dma.hbm_to_vmem [thread:$0]  %s609, 4096, %s611, %s600, 256, 256, 16
        $region72: #{disaster_net_forward.1} parent=47 // pred_fallthru
          _
        // Predicated region
        $region73: #{disaster_net_forward.1} parent=47 // pred_check
          %p617 = pneg %p292
        $region74: #{disaster_net_forward.1} parent=47 // pred_check_branch
          %619 = sbr.rel (%p617) target = $region76
        $region75: #{disaster_net_forward.1} parent=47 // pred_region
          %p620 = scmp.lt.s32.totalorder %s32, 1
          %s621 = scalar_select %p620, %s32, 1
          %s622 = smul.addr %s621, 4
          %s623 = scalar_lea.vmem %s10, %s622
        $region76: #{disaster_net_forward.1} parent=47 // pred_fallthru
          _
        // Predicated region
        $region77: #{disaster_net_forward.1} parent=47 // pred_check
          %p624 = pneg %p318
        $region78: #{disaster_net_forward.1} parent=47 // pred_check_branch
          %626 = sbr.rel (%p624) target = $region80
        $region79: #{disaster_net_forward.1} parent=47 // pred_region
          %s627 = sand.u32 %s32, 1
          %s628 = scalar_lea.sflag [#allocation7], %s627
          %s629 = sand.u32 %s308, 1
          %s630 = smul.addr %s629, 256
          %s631 = scalar_lea.vmem [#allocation8], %s630
          %s633 = ssub.s32 4096, 4096
          %634 = vsyncadd %s628, %s633
          %s635 = smul.addr %s32, 64
          %s636 = smul.addr %s635, 64
          %s637 = scalar_lea.hbm %s11, %s636
          %s638 = sshll.u32 %s631, 4
          %s639 = int_to_ptr.vmem [resolvable:$true] %s638
          %644 = dma.hbm_to_vmem [thread:$0]  %s637, 4096, %s639, %s628, 64, 64, 4
        $region80: #{disaster_net_forward.1} parent=47 // pred_fallthru
          _
        // Predicated region
        $region81: #{disaster_net_forward.1} parent=47 // pred_check
          %p645 = pneg %p344
        $region82: #{disaster_net_forward.1} parent=47 // pred_check_branch
          %647 = sbr.rel (%p645) target = $region84
        $region83: #{disaster_net_forward.1} parent=47 // pred_region
          %p648 = scmp.lt.s32.totalorder %s32, 1
          %s649 = scalar_select %p648, %s32, 1
          %s650 = scalar_lea.vmem %s12, %s649
        $region84: #{disaster_net_forward.1} parent=47 // pred_fallthru
          _
        // Predicated region
        $region85: #{disaster_net_forward.1} parent=47 // pred_check
          %p651 = pneg %p370
        $region86: #{disaster_net_forward.1} parent=47 // pred_check_branch
          %653 = sbr.rel (%p651) target = $region88
        $region87: #{disaster_net_forward.1} parent=47 // pred_region
          %p654 = scmp.lt.s32.totalorder %s32, 1
          %s655 = scalar_select %p654, %s32, 1
          %s656 = scalar_lea.vmem %s13, %s655
        $region88: #{disaster_net_forward.1} parent=47 // pred_fallthru
          _
        // Predicated region
        $region89: #{disaster_net_forward.1} parent=47 // pred_check
          %p657 = pneg %p396
        $region90: #{disaster_net_forward.1} parent=47 // pred_check_branch
          %659 = sbr.rel (%p657) target = $region92
        $region91: #{disaster_net_forward.1} parent=47 // pred_region
          %p660 = scmp.lt.s32.totalorder %s32, 1
          %s661 = scalar_select %p660, %s32, 1
          %s662 = scalar_lea.vmem %s14, %s661
        $region92: #{disaster_net_forward.1} parent=47 // pred_fallthru
          _
      $region48: #{disaster_net_forward.1} parent=5 // pred_fallthru
        _
      %p663 = scmp.le.s32.totalorder 1, %s32
      %p664 = scmp.lt.s32.totalorder %s32, 3
      %p665 = pnand %p663, %p664
      %p666 = pneg %p665
      // Predicated region
      $region93: #{disaster_net_forward.1} parent=5 // pred_check
        _
      $region94: #{disaster_net_forward.1} parent=5 // pred_check_branch
        %668 = sbr.rel (%p665) target = $region96
      $region95: #{disaster_net_forward.1} parent=5 // pred_region
        %s669 = ssub.s32 %s32, 1
        %s670 = sand.u32 %s129, 1
        %s671 = scalar_lea.sflag [#allocation4], %s670
        %s672 = sand.u32 %s129, 1
        %s673 = smul.addr %s672, 384
        %s674 = scalar_lea.vmem [#allocation3], %s673
        // Predicated region
        $region97: #{disaster_net_forward.1} parent=95 // pred_check
          %p675 = pneg %p142
        $region98: #{disaster_net_forward.1} parent=95 // pred_check_branch
          %677 = sbr.rel (%p675) target = $region100
        $region99: #{disaster_net_forward.1} parent=95 // pred_region
          %678 = dma.done %s671, 6144
        $region100: #{disaster_net_forward.1} parent=95 // pred_fallthru
          _
        %s679 = sand.u32 %s37, 1
        %s680 = scalar_lea.sflag [#allocation7], %s679
        %s681 = sand.u32 %s259, 1
        %s682 = smul.addr %s681, 256
        %s683 = scalar_lea.vmem [#allocation6], %s682
        // Predicated region
        $region101: #{disaster_net_forward.1} parent=95 // pred_check
          %p684 = pneg %p272
        $region102: #{disaster_net_forward.1} parent=95 // pred_check_branch
          %686 = sbr.rel (%p684) target = $region104
        $region103: #{disaster_net_forward.1} parent=95 // pred_region
          %687 = dma.done %s680, 4096
        $region104: #{disaster_net_forward.1} parent=95 // pred_fallthru
          _
        %s688 = sand.u32 %s37, 1
        %s689 = scalar_lea.sflag [#allocation7], %s688
        %s690 = sand.u32 %s311, 1
        %s691 = smul.addr %s690, 256
        %s692 = scalar_lea.vmem [#allocation8], %s691
        // Predicated region
        $region105: #{disaster_net_forward.1} parent=95 // pred_check
          %p693 = pneg %p324
        $region106: #{disaster_net_forward.1} parent=95 // pred_check_branch
          %695 = sbr.rel (%p693) target = $region108
        $region107: #{disaster_net_forward.1} parent=95 // pred_region
          %696 = dma.done %s689, 4096
        $region108: #{disaster_net_forward.1} parent=95 // pred_fallthru
          _
        %p697 = pneg %p53
        %p698 = pneg %p50
        %p699 = pneg %p74
        %p700 = pneg %p71
        %p701 = pneg %p95
        %p702 = pneg %p92
        %p703 = pneg %p116
        %p704 = pneg %p113
        %s705 = sand.u32 %s129, 1
        %s706 = scalar_lea.sflag [#allocation4], %s705
        %s707 = sand.u32 %s129, 1
        %s708 = smul.addr %s707, 384
        %s709 = scalar_lea.vmem [#allocation3], %s708
        %p710 = pneg %p142
        %p711 = pneg %p139
        %p712 = scmp.lt.s32.totalorder %s37, 1
        %s713 = scalar_select %p712, %s37, 1
        %s714 = smul.addr %s713, 6
        %s715 = scalar_lea.vmem %s5, %s714
        %p716 = pneg %p168
        %p717 = pneg %p165
        %p718 = scmp.lt.s32.totalorder %s37, 1
        %s719 = scalar_select %p718, %s37, 1
        %s720 = scalar_lea.vmem %s6, %s719
        %p721 = pneg %p194
        %p722 = pneg %p191
        %p723 = scmp.lt.s32.totalorder %s37, 1
        %s724 = scalar_select %p723, %s37, 1
        %s725 = scalar_lea.vmem %s7, %s724
        %p726 = pneg %p220
        %p727 = pneg %p217
        %p728 = scmp.lt.s32.totalorder %s37, 1
        %s729 = scalar_select %p728, %s37, 1
        %s730 = scalar_lea.vmem %s8, %s729
        %p731 = pneg %p246
        %p732 = pneg %p243
        %s733 = sand.u32 %s37, 1
        %s734 = scalar_lea.sflag [#allocation7], %s733
        %s735 = sand.u32 %s259, 1
        %s736 = smul.addr %s735, 256
        %s737 = scalar_lea.vmem [#allocation6], %s736
        %p738 = pneg %p272
        %p739 = pneg %p269
        %p740 = scmp.lt.s32.totalorder %s37, 1
        %s741 = scalar_select %p740, %s37, 1
        %s742 = smul.addr %s741, 4
        %s743 = scalar_lea.vmem %s10, %s742
        %p744 = pneg %p298
        %p745 = pneg %p295
        %s746 = sand.u32 %s37, 1
        %s747 = scalar_lea.sflag [#allocation7], %s746
        %s748 = sand.u32 %s311, 1
        %s749 = smul.addr %s748, 256
        %s750 = scalar_lea.vmem [#allocation8], %s749
        %p751 = pneg %p324
        %p752 = pneg %p321
        %p753 = scmp.lt.s32.totalorder %s37, 1
        %s754 = scalar_select %p753, %s37, 1
        %s755 = scalar_lea.vmem %s12, %s754
        %p756 = pneg %p350
        %p757 = pneg %p347
        %p758 = scmp.lt.s32.totalorder %s37, 1
        %s759 = scalar_select %p758, %s37, 1
        %s760 = scalar_lea.vmem %s13, %s759
        %p761 = pneg %p376
        %p762 = pneg %p373
        %p763 = scmp.lt.s32.totalorder %s37, 1
        %s764 = scalar_select %p763, %s37, 1
        %s765 = scalar_lea.vmem %s14, %s764
        %p766 = pneg %p402
        %p767 = pneg %p399
        %p768 = pneg %p423
        %p769 = pneg %p420
        %p770 = pneg %p444
        %p771 = pneg %p441
        %p772 = pneg %p465
        %p773 = pneg %p462
        %p774 = pneg %p486
        %p775 = pneg %p483
        %p776 = pneg %p507
        %p777 = pneg %p504
        %p778 = scmp.lt.s32.totalorder %s37, 1
        %s779 = scalar_select %p778, %s37, 1
        %s780 = smul.addr %s779, 6
        %s781 = scalar_lea.vmem %s5, %s780
        %p782 = scmp.lt.s32.totalorder %s37, 1
        %s783 = scalar_select %p782, %s37, 1
        %s784 = scalar_lea.vmem %s6, %s783
        %p785 = scmp.lt.s32.totalorder %s37, 1
        %s786 = scalar_select %p785, %s37, 1
        %s787 = scalar_lea.vmem %s7, %s786
        %p788 = scmp.lt.s32.totalorder %s37, 1
        %s789 = scalar_select %p788, %s37, 1
        %s790 = scalar_lea.vmem %s8, %s789
        %p791 = scmp.lt.s32.totalorder %s37, 1
        %s792 = scalar_select %p791, %s37, 1
        %s793 = smul.addr %s792, 4
        %s794 = scalar_lea.vmem %s10, %s793
        %p795 = scmp.lt.s32.totalorder %s37, 1
        %s796 = scalar_select %p795, %s37, 1
        %s797 = scalar_lea.vmem %s12, %s796
        %p798 = scmp.lt.s32.totalorder %s37, 1
        %s799 = scalar_select %p798, %s37, 1
        %s800 = scalar_lea.vmem %s13, %s799
        %p801 = scmp.lt.s32.totalorder %s37, 1
        %s802 = scalar_select %p801, %s37, 1
        %s803 = scalar_lea.vmem %s14, %s802
        %p805 = scmp.eq.s32.totalorder %s37, 0
        // Predicated region
        $region109: #{disaster_net_forward.1} parent=95 // pred_check
          %p806 = pneg %p805
        $region110: #{disaster_net_forward.1} parent=95 // pred_check_branch
          %808 = sbr.rel (%p806) target = $region112
        $region111: #{disaster_net_forward.1} parent=95 // pred_region
          %v809 = vld [vmem:[%s0] sm:$0xff]
          %v810 = vld [vmem:[%s0 + $0x8] sm:$0xff]
          %v811 = vld [vmem:[%s2] sm:$0x1]
          %v812 = vld [vmem:[%s3] sm:$0x1]
          %813 = vadd.xlane.f32.xlu0 %v809
          %v814 = vpop.xlane.xlu0 %813
          %815 = vadd.xlane.f32.xlu0 %v810
          %v816 = vpop.xlane.xlu0 %815
          %v817 = vrcp.pop 128.0
          %v818 = vmul.f32 %v814, %v817
          %v819 = vmul.f32 %v816, %v817
          %v820 = vsub.f32 %v809, %v818
          %v821 = vsub.f32 %v810, %v819
          %v822 = vmul.f32 %v820, %v820
          %v823 = vmul.f32 %v821, %v821
          %824 = vadd.xlane.f32.xlu0 %v822
          %v825 = vpop.xlane.xlu0 %824
          %826 = vadd.xlane.f32.xlu0 %v823
          %v827 = vpop.xlane.xlu0 %826
          %v828 = vmul.f32 %v825, %v817
          %v829 = vmul.f32 %v827, %v817
          %v830 = vadd.f32 %v828, 1e-12
          %v831 = vadd.f32 %v829, 1e-12
          %v832 = vrsqrt.pop %v830
          %v833 = vrsqrt.pop %v831
          %v834 = vmul.f32 %v820, %v832
          %v835 = vmul.f32 %v821, %v833
          %v837 = vlaneseq
          %v838 = vshrl.u32 %v837, 7
          %v839 = vsub.s32 0, %v838
          %v840 = vrot.slane %v811, %v839
          %v842 = vmul.f32 %v834, %v840
          %v843 = vmul.f32 %v835, %v840
          %v845 = vlaneseq
          %v846 = vshrl.u32 %v845, 7
          %v847 = vsub.s32 0, %v846
          %v848 = vrot.slane %v812, %v847
          %v850 = vadd.f32 %v842, %v848
          %v851 = vadd.f32 %v843, %v848
          %852 = vst [vmem:[#allocation2] sm:$0xff] %v850
          %853 = vst [vmem:[#allocation2 + $0x8] sm:$0xff] %v851
        $region112: #{disaster_net_forward.1} parent=95 // pred_fallthru
          _
        %v854 = vld [vmem:[#allocation2] sm:$0xff]
        %v855 = vld [vmem:[#allocation2 + $0x8] sm:$0xff]
        %v856 = vpack.c.bf16 %v855, %v854
        %v857 = vld [vmem:[%s674] sm:$0xff]
        %v858 = vld [vmem:[%s674 + $0x8] sm:$0xff]
        %v859 = vld [vmem:[%s674 + $0x10] sm:$0xff]
        %v860 = vld [vmem:[%s674 + $0x18] sm:$0xff]
        %v861 = vld [vmem:[%s674 + $0x20] sm:$0xff]
        %v862 = vld [vmem:[%s674 + $0x28] sm:$0xff]
        %v863 = vld [vmem:[%s674 + $0x30] sm:$0xff]
        %v864 = vld [vmem:[%s674 + $0x38] sm:$0xff]
        %v865 = vld [vmem:[%s674 + $0x40] sm:$0xff]
        %v866 = vld [vmem:[%s674 + $0x48] sm:$0xff]
        %v867 = vld [vmem:[%s674 + $0x50] sm:$0xff]
        %v868 = vld [vmem:[%s674 + $0x58] sm:$0xff]
        %v869 = vld [vmem:[%s674 + $0x60] sm:$0xff]
        %v870 = vld [vmem:[%s674 + $0x68] sm:$0xff]
        %v871 = vld [vmem:[%s674 + $0x70] sm:$0xff]
        %v872 = vld [vmem:[%s674 + $0x78] sm:$0xff]
        %v873 = vld [vmem:[%s674 + $0x80] sm:$0xff]
        %v874 = vld [vmem:[%s674 + $0x88] sm:$0xff]
        %v875 = vld [vmem:[%s674 + $0x90] sm:$0xff]
        %v876 = vld [vmem:[%s674 + $0x98] sm:$0xff]
        %v877 = vld [vmem:[%s674 + $0xa0] sm:$0xff]
        %v878 = vld [vmem:[%s674 + $0xa8] sm:$0xff]
        %v879 = vld [vmem:[%s674 + $0xb0] sm:$0xff]
        %v880 = vld [vmem:[%s674 + $0xb8] sm:$0xff]
        %v881 = vld [vmem:[%s674 + $0xc0] sm:$0xff]
        %v882 = vld [vmem:[%s674 + $0xc8] sm:$0xff]
        %v883 = vld [vmem:[%s674 + $0xd0] sm:$0xff]
        %v884 = vld [vmem:[%s674 + $0xd8] sm:$0xff]
        %v885 = vld [vmem:[%s674 + $0xe0] sm:$0xff]
        %v886 = vld [vmem:[%s674 + $0xe8] sm:$0xff]
        %v887 = vld [vmem:[%s674 + $0xf0] sm:$0xff]
        %v888 = vld [vmem:[%s674 + $0xf8] sm:$0xff]
        %v889 = vld [vmem:[%s674 + $0x100] sm:$0xff]
        %v890 = vld [vmem:[%s674 + $0x108] sm:$0xff]
        %v891 = vld [vmem:[%s674 + $0x110] sm:$0xff]
        %v892 = vld [vmem:[%s674 + $0x118] sm:$0xff]
        %v893 = vld [vmem:[%s674 + $0x120] sm:$0xff]
        %v894 = vld [vmem:[%s674 + $0x128] sm:$0xff]
        %v895 = vld [vmem:[%s674 + $0x130] sm:$0xff]
        %v896 = vld [vmem:[%s674 + $0x138] sm:$0xff]
        %v897 = vld [vmem:[%s674 + $0x140] sm:$0xff]
        %v898 = vld [vmem:[%s674 + $0x148] sm:$0xff]
        %v899 = vld [vmem:[%s674 + $0x150] sm:$0xff]
        %v900 = vld [vmem:[%s674 + $0x158] sm:$0xff]
        %v901 = vld [vmem:[%s674 + $0x160] sm:$0xff]
        %v902 = vld [vmem:[%s674 + $0x168] sm:$0xff]
        %v903 = vld [vmem:[%s674 + $0x170] sm:$0xff]
        %v904 = vld [vmem:[%s674 + $0x178] sm:$0xff]
        %v905 = vld [vmem:[%s781] sm:$0x3f]
        %v907 = vlaneseq
        %v908 = vshrl.u32 %v907, 7
        %v909 = vsub.s32 0, %v908
        %v910 = vrot.slane %v905, %v909
        %v911 = vlaneseq
        %v912 = vshrl.u32 %v911, 7
        %v913 = vsub.s32 1, %v912
        %v914 = vrot.slane %v905, %v913
        %v915 = vlaneseq
        %v916 = vshrl.u32 %v915, 7
        %v917 = vsub.s32 2, %v916
        %v918 = vrot.slane %v905, %v917
        %v919 = vlaneseq
        %v920 = vshrl.u32 %v919, 7
        %v921 = vsub.s32 3, %v920
        %v922 = vrot.slane %v905, %v921
        %v923 = vlaneseq
        %v924 = vshrl.u32 %v923, 7
        %v925 = vsub.s32 4, %v924
        %v926 = vrot.slane %v905, %v925
        %v927 = vlaneseq
        %v928 = vshrl.u32 %v927, 7
        %v929 = vsub.s32 5, %v928
        %v930 = vrot.slane %v905, %v929
        %v985 = vunpack.c.l.b16 %v857
        %v986 = vunpack.c.h.b16 %v857
        %v987 = vunpack.c.l.b16 %v858
        %v988 = vunpack.c.h.b16 %v858
        %v989 = vunpack.c.l.b16 %v859
        %v990 = vunpack.c.h.b16 %v859
        %v991 = vunpack.c.l.b16 %v860
        %v992 = vunpack.c.h.b16 %v860
        %v993 = vunpack.c.l.b16 %v861
        %v994 = vunpack.c.h.b16 %v861
        %v995 = vunpack.c.l.b16 %v862
        %v996 = vunpack.c.h.b16 %v862
        %v997 = vunpack.c.l.b16 %v863
        %v998 = vunpack.c.h.b16 %v863
        %v999 = vunpack.c.l.b16 %v864
        %v1000 = vunpack.c.h.b16 %v864
        %v1001 = vunpack.c.l.b16 %v865
        %v1002 = vunpack.c.h.b16 %v865
        %v1003 = vunpack.c.l.b16 %v866
        %v1004 = vunpack.c.h.b16 %v866
        %v1005 = vunpack.c.l.b16 %v867
        %v1006 = vunpack.c.h.b16 %v867
        %v1007 = vunpack.c.l.b16 %v868
        %v1008 = vunpack.c.h.b16 %v868
        %v1009 = vunpack.c.l.b16 %v869
        %v1010 = vunpack.c.h.b16 %v869
        %v1011 = vunpack.c.l.b16 %v870
        %v1012 = vunpack.c.h.b16 %v870
        %v1013 = vunpack.c.l.b16 %v871
        %v1014 = vunpack.c.h.b16 %v871
        %v1015 = vunpack.c.l.b16 %v872
        %v1016 = vunpack.c.h.b16 %v872
        %v1017 = vunpack.c.l.b16 %v873
        %v1018 = vunpack.c.h.b16 %v873
        %v1019 = vunpack.c.l.b16 %v874
        %v1020 = vunpack.c.h.b16 %v874
        %v1021 = vunpack.c.l.b16 %v875
        %v1022 = vunpack.c.h.b16 %v875
        %v1023 = vunpack.c.l.b16 %v876
        %v1024 = vunpack.c.h.b16 %v876
        %v1025 = vunpack.c.l.b16 %v877
        %v1026 = vunpack.c.h.b16 %v877
        %v1027 = vunpack.c.l.b16 %v878
        %v1028 = vunpack.c.h.b16 %v878
        %v1029 = vunpack.c.l.b16 %v879
        %v1030 = vunpack.c.h.b16 %v879
        %v1031 = vunpack.c.l.b16 %v880
        %v1032 = vunpack.c.h.b16 %v880
        %v1033 = vunpack.c.l.b16 %v881
        %v1034 = vunpack.c.h.b16 %v881
        %v1035 = vunpack.c.l.b16 %v882
        %v1036 = vunpack.c.h.b16 %v882
        %v1037 = vunpack.c.l.b16 %v883
        %v1038 = vunpack.c.h.b16 %v883
        %v1039 = vunpack.c.l.b16 %v884
        %v1040 = vunpack.c.h.b16 %v884
        %v1041 = vunpack.c.l.b16 %v885
        %v1042 = vunpack.c.h.b16 %v885
        %v1043 = vunpack.c.l.b16 %v886
        %v1044 = vunpack.c.h.b16 %v886
        %v1045 = vunpack.c.l.b16 %v887
        %v1046 = vunpack.c.h.b16 %v887
        %v1047 = vunpack.c.l.b16 %v888
        %v1048 = vunpack.c.h.b16 %v888
        %v1049 = vunpack.c.l.b16 %v889
        %v1050 = vunpack.c.h.b16 %v889
        %v1051 = vunpack.c.l.b16 %v890
        %v1052 = vunpack.c.h.b16 %v890
        %v1053 = vunpack.c.l.b16 %v891
        %v1054 = vunpack.c.h.b16 %v891
        %v1055 = vunpack.c.l.b16 %v892
        %v1056 = vunpack.c.h.b16 %v892
        %v1057 = vunpack.c.l.b16 %v893
        %v1058 = vunpack.c.h.b16 %v893
        %v1059 = vunpack.c.l.b16 %v894
        %v1060 = vunpack.c.h.b16 %v894
        %v1061 = vunpack.c.l.b16 %v895
        %v1062 = vunpack.c.h.b16 %v895
        %v1063 = vunpack.c.l.b16 %v896
        %v1064 = vunpack.c.h.b16 %v896
        %v1065 = vunpack.c.l.b16 %v897
        %v1066 = vunpack.c.h.b16 %v897
        %v1067 = vunpack.c.l.b16 %v898
        %v1068 = vunpack.c.h.b16 %v898
        %v1069 = vunpack.c.l.b16 %v899
        %v1070 = vunpack.c.h.b16 %v899
        %v1071 = vunpack.c.l.b16 %v900
        %v1072 = vunpack.c.h.b16 %v900
        %v1073 = vunpack.c.l.b16 %v901
        %v1074 = vunpack.c.h.b16 %v901
        %v1075 = vunpack.c.l.b16 %v902
        %v1076 = vunpack.c.h.b16 %v902
        %v1077 = vunpack.c.l.b16 %v903
        %v1078 = vunpack.c.h.b16 %v903
        %v1079 = vunpack.c.l.b16 %v904
        %v1080 = vunpack.c.h.b16 %v904
        %v1081 = vpack.c.b16 %v991, %v985
        %v1082 = vpack.c.b16 %v992, %v986
        %v1083 = vpack.c.b16 %v993, %v987
        %v1084 = vpack.c.b16 %v994, %v988
        %v1085 = vpack.c.b16 %v995, %v989
        %v1086 = vpack.c.b16 %v996, %v990
        %v1087 = vpack.c.b16 %v1003, %v997
        %v1088 = vpack.c.b16 %v1004, %v998
        %v1089 = vpack.c.b16 %v1005, %v999
        %v1090 = vpack.c.b16 %v1006, %v1000
        %v1091 = vpack.c.b16 %v1007, %v1001
        %v1092 = vpack.c.b16 %v1008, %v1002
        %v1093 = vpack.c.b16 %v1015, %v1009
        %v1094 = vpack.c.b16 %v1016, %v1010
        %v1095 = vpack.c.b16 %v1017, %v1011
        %v1096 = vpack.c.b16 %v1018, %v1012
        %v1097 = vpack.c.b16 %v1019, %v1013
        %v1098 = vpack.c.b16 %v1020, %v1014
        %v1099 = vpack.c.b16 %v1027, %v1021
        %v1100 = vpack.c.b16 %v1028, %v1022
        %v1101 = vpack.c.b16 %v1029, %v1023
        %v1102 = vpack.c.b16 %v1030, %v1024
        %v1103 = vpack.c.b16 %v1031, %v1025
        %v1104 = vpack.c.b16 %v1032, %v1026
        %v1105 = vpack.c.b16 %v1039, %v1033
        %v1106 = vpack.c.b16 %v1040, %v1034
        %v1107 = vpack.c.b16 %v1041, %v1035
        %v1108 = vpack.c.b16 %v1042, %v1036
        %v1109 = vpack.c.b16 %v1043, %v1037
        %v1110 = vpack.c.b16 %v1044, %v1038
        %v1111 = vpack.c.b16 %v1051, %v1045
        %v1112 = vpack.c.b16 %v1052, %v1046
        %v1113 = vpack.c.b16 %v1053, %v1047
        %v1114 = vpack.c.b16 %v1054, %v1048
        %v1115 = vpack.c.b16 %v1055, %v1049
        %v1116 = vpack.c.b16 %v1056, %v1050
        %v1117 = vpack.c.b16 %v1063, %v1057
        %v1118 = vpack.c.b16 %v1064, %v1058
        %v1119 = vpack.c.b16 %v1065, %v1059
        %v1120 = vpack.c.b16 %v1066, %v1060
        %v1121 = vpack.c.b16 %v1067, %v1061
        %v1122 = vpack.c.b16 %v1068, %v1062
        %v1123 = vpack.c.b16 %v1075, %v1069
        %v1124 = vpack.c.b16 %v1076, %v1070
        %v1125 = vpack.c.b16 %v1077, %v1071
        %v1126 = vpack.c.b16 %v1078, %v1072
        %v1127 = vpack.c.b16 %v1079, %v1073
        %v1128 = vpack.c.b16 %v1080, %v1074
        %1177 = vmatprep.subr.bf16.mxu0 %v1082
        %1178 = vmatpush1.bf16.msra.mxu0 %v1081
        %1179 = vmatprep.subr.bf16.mxu0 %v1088
        %1180 = vmatpush1.bf16.msra.mxu0 %v1087
        %1181 = vmatprep.subr.bf16.mxu0 %v1094
        %1182 = vmatpush1.bf16.msra.mxu0 %v1093
        %1183 = vmatprep.subr.bf16.mxu0 %v1100
        %1184 = vmatpush1.bf16.msra.mxu0 %v1099
        %1185 = vmatprep.subr.bf16.mxu0 %v1106
        %1186 = vmatpush1.bf16.msra.mxu0 %v1105
        %1187 = vmatprep.subr.bf16.mxu0 %v1112
        %1188 = vmatpush1.bf16.msra.mxu0 %v1111
        %1189 = vmatprep.subr.bf16.mxu0 %v1118
        %1190 = vmatpush1.bf16.msra.mxu0 %v1117
        %1191 = vmatprep.subr.bf16.mxu0 %v1124
        %1192 = vmatpush1.bf16.msra.mxu0 %v1123
        %1193 = vmatprep.subr.bf16.mxu0 0
        %1194 = vmatpush1.bf16.msra.mxu0 0
        %1195 = vmatprep.subr.bf16.mxu0 0
        %1196 = vmatpush1.bf16.msra.mxu0 0
        %1197 = vmatprep.subr.bf16.mxu0 0
        %1198 = vmatpush1.bf16.msra.mxu0 0
        %1199 = vmatprep.subr.bf16.mxu0 0
        %1200 = vmatpush1.bf16.msra.mxu0 0
        %1201 = vmatprep.subr.bf16.mxu0 0
        %1202 = vmatpush1.bf16.msra.mxu0 0
        %1203 = vmatprep.subr.bf16.mxu0 0
        %1204 = vmatpush1.bf16.msra.mxu0 0
        %1205 = vmatprep.subr.bf16.mxu0 0
        %1206 = vmatpush1.bf16.msra.mxu0 0
        %1207 = vmatprep.subr.bf16.mxu0 0
        %1208 = vmatpush1.bf16.msra.mxu0 0
        %1209 = vmatprep.mubr.bf16.mxu0 0
        %1210 = vmatmul.mubr.bf16.gmra.mrb[0].mxu0 %v856
        %v1211 = vpop.f32.mrb[0].mxu0
        %v1212 = vadd.f32 %v910, %v1211
        %v1213 = vpop.f32.mrb[0].mxu0
        %v1214 = vadd.f32 %v914, %v1213
        %v1215 = vpop.f32.mrb[0].mxu0
        %v1216 = vadd.f32 %v910, %v1215
        %v1217 = vpop.f32.mrb[0].mxu0
        %v1218 = vadd.f32 %v914, %v1217
        %1219 = vdwg.mxu0
        %1220 = vmatprep.subr.bf16.mxu0 %v1084
        %1221 = vmatpush1.bf16.msra.mxu0 %v1083
        %1222 = vmatprep.subr.bf16.mxu0 %v1090
        %1223 = vmatpush1.bf16.msra.mxu0 %v1089
        %1224 = vmatprep.subr.bf16.mxu0 %v1096
        %1225 = vmatpush1.bf16.msra.mxu0 %v1095
        %1226 = vmatprep.subr.bf16.mxu0 %v1102
        %1227 = vmatpush1.bf16.msra.mxu0 %v1101
        %1228 = vmatprep.subr.bf16.mxu0 %v1108
        %1229 = vmatpush1.bf16.msra.mxu0 %v1107
        %1230 = vmatprep.subr.bf16.mxu0 %v1114
        %1231 = vmatpush1.bf16.msra.mxu0 %v1113
        %1232 = vmatprep.subr.bf16.mxu0 %v1120
        %1233 = vmatpush1.bf16.msra.mxu0 %v1119
        %1234 = vmatprep.subr.bf16.mxu0 %v1126
        %1235 = vmatpush1.bf16.msra.mxu0 %v1125
        %1236 = vmatprep.subr.bf16.mxu0 0
        %1237 = vmatpush1.bf16.msra.mxu0 0
        %1238 = vmatprep.subr.bf16.mxu0 0
        %1239 = vmatpush1.bf16.msra.mxu0 0
        %1240 = vmatprep.subr.bf16.mxu0 0
        %1241 = vmatpush1.bf16.msra.mxu0 0
        %1242 = vmatprep.subr.bf16.mxu0 0
        %1243 = vmatpush1.bf16.msra.mxu0 0
        %1244 = vmatprep.subr.bf16.mxu0 0
        %1245 = vmatpush1.bf16.msra.mxu0 0
        %1246 = vmatprep.subr.bf16.mxu0 0
        %1247 = vmatpush1.bf16.msra.mxu0 0
        %1248 = vmatprep.subr.bf16.mxu0 0
        %1249 = vmatpush1.bf16.msra.mxu0 0
        %1250 = vmatprep.subr.bf16.mxu0 0
        %1251 = vmatpush1.bf16.msra.mxu0 0
        %1252 = vmatprep.mubr.bf16.mxu0 0
        %1253 = vmatmul.mubr.bf16.gmra.mrb[0].mxu0 %v856
        %v1254 = vpop.f32.mrb[0].mxu0
        %v1255 = vadd.f32 %v918, %v1254
        %v1256 = vpop.f32.mrb[0].mxu0
        %v1257 = vadd.f32 %v922, %v1256
        %v1258 = vpop.f32.mrb[0].mxu0
        %v1259 = vadd.f32 %v918, %v1258
        %v1260 = vpop.f32.mrb[0].mxu0
        %v1261 = vadd.f32 %v922, %v1260
        %1262 = vdwg.mxu0
        %1263 = vmatprep.subr.bf16.mxu0 %v1086
        %1264 = vmatpush1.bf16.msra.mxu0 %v1085
        %1265 = vmatprep.subr.bf16.mxu0 %v1092
        %1266 = vmatpush1.bf16.msra.mxu0 %v1091
        %1267 = vmatprep.subr.bf16.mxu0 %v1098
        %1268 = vmatpush1.bf16.msra.mxu0 %v1097
        %1269 = vmatprep.subr.bf16.mxu0 %v1104
        %1270 = vmatpush1.bf16.msra.mxu0 %v1103
        %1271 = vmatprep.subr.bf16.mxu0 %v1110
        %1272 = vmatpush1.bf16.msra.mxu0 %v1109
        %1273 = vmatprep.subr.bf16.mxu0 %v1116
        %1274 = vmatpush1.bf16.msra.mxu0 %v1115
        %1275 = vmatprep.subr.bf16.mxu0 %v1122
        %1276 = vmatpush1.bf16.msra.mxu0 %v1121
        %1277 = vmatprep.subr.bf16.mxu0 %v1128
        %1278 = vmatpush1.bf16.msra.mxu0 %v1127
        %1279 = vmatprep.subr.bf16.mxu0 0
        %1280 = vmatpush1.bf16.msra.mxu0 0
        %1281 = vmatprep.subr.bf16.mxu0 0
        %1282 = vmatpush1.bf16.msra.mxu0 0
        %1283 = vmatprep.subr.bf16.mxu0 0
        %1284 = vmatpush1.bf16.msra.mxu0 0
        %1285 = vmatprep.subr.bf16.mxu0 0
        %1286 = vmatpush1.bf16.msra.mxu0 0
        %1287 = vmatprep.subr.bf16.mxu0 0
        %1288 = vmatpush1.bf16.msra.mxu0 0
        %1289 = vmatprep.subr.bf16.mxu0 0
        %1290 = vmatpush1.bf16.msra.mxu0 0
        %1291 = vmatprep.subr.bf16.mxu0 0
        %1292 = vmatpush1.bf16.msra.mxu0 0
        %1293 = vmatprep.subr.bf16.mxu0 0
        %1294 = vmatpush1.bf16.msra.mxu0 0
        %1295 = vmatprep.mubr.bf16.mxu0 0
        %1296 = vmatmul.mubr.bf16.gmra.mrb[0].mxu0 %v856
        %v1297 = vpop.f32.mrb[0].mxu0
        %v1298 = vadd.f32 %v926, %v1297
        %v1299 = vpop.f32.mrb[0].mxu0
        %v1300 = vadd.f32 %v930, %v1299
        %v1301 = vpop.f32.mrb[0].mxu0
        %v1302 = vadd.f32 %v926, %v1301
        %v1303 = vpop.f32.mrb[0].mxu0
        %v1304 = vadd.f32 %v930, %v1303
        %1305 = vdwg.mxu0
        %v1306 = vpack.c.bf16 %v1216, %v1212
        %v1307 = vpack.c.bf16 %v1218, %v1214
        %v1308 = vpack.c.bf16 %v1259, %v1255
        %v1309 = vpack.c.bf16 %v1261, %v1257
        %v1310 = vpack.c.bf16 %v1302, %v1298
        %v1311 = vpack.c.bf16 %v1304, %v1300
        %v1312 = vld [vmem:[%s1] sm:$0xff]
        %v1313 = vld [vmem:[%s1 + $0x8] sm:$0xff]
        %1314 = vmatprep.subr.bf16.mxu0 0
        %1315 = vmatpush1.bf16.xpose.msra.mxu0 %v1307
        %1316 = vmatprep.subr.bf16.mxu0 0
        %1317 = vmatpush1.bf16.xpose.msra.mxu0 0
        %1318 = vmatprep.subr.bf16.mxu0 0
        %1319 = vmatpush1.bf16.xpose.msra.mxu0 0
        %1320 = vmatprep.subr.bf16.mxu0 0
        %1321 = vmatpush1.bf16.xpose.msra.mxu0 0
        %1322 = vmatprep.subr.bf16.mxu0 0
        %1323 = vmatpush1.bf16.xpose.msra.mxu0 0
        %1324 = vmatprep.subr.bf16.mxu0 0
        %1325 = vmatpush1.bf16.xpose.msra.mxu0 0
        %1326 = vmatprep.subr.bf16.mxu0 0
        %1327 = vmatpush1.bf16.xpose.msra.mxu0 0
        %1328 = vmatprep.subr.bf16.mxu0 0
        %1329 = vmatpush1.bf16.xpose.msra.mxu0 0
        %1330 = vmatprep.subr.bf16.mxu0 0
        %1331 = vmatpush1.bf16.xpose.msra.mxu0 0
        %1332 = vmatprep.subr.bf16.mxu0 0
        %1333 = vmatpush1.bf16.xpose.msra.mxu0 0
        %1334 = vmatprep.subr.bf16.mxu0 0
        %1335 = vmatpush1.bf16.xpose.msra.mxu0 0
        %1336 = vmatprep.subr.bf16.mxu0 0
        %1337 = vmatpush1.bf16.xpose.msra.mxu0 0
        %1338 = vmatprep.subr.bf16.mxu0 0
        %1339 = vmatpush1.bf16.xpose.msra.mxu0 0
        %1340 = vmatprep.subr.bf16.mxu0 0
        %1341 = vmatpush1.bf16.xpose.msra.mxu0 0
        %1342 = vmatprep.subr.bf16.mxu0 0
        %1343 = vmatpush1.bf16.xpose.msra.mxu0 0
        %1344 = vmatprep.subr.bf16.mxu0 0
        %1345 = vmatpush1.bf16.xpose.msra.mxu0 0
        %1346 = vmatprep.mubr.bf16.mxu0 0
        %1347 = vmatmul.mubr.bf16.gmra.mrb[0].mxu0 %v1306
        %v1348 = vpop.f32.mrb[0].mxu0
        %v1349 = vadd.f32 %v1312, %v1348
        %v1350 = vpop.f32.mrb[0].mxu0
        %v1351 = vpop.f32.mrb[0].mxu0
        %v1352 = vadd.f32 %v1313, %v1351
        %v1353 = vpop.f32.mrb[0].mxu0
        %1354 = vdwg.mxu0
        %vm1355 = vcmask 130048
        %v1356 = vsel %vm1355, %v1349, -inf
        %1357 = vmax.xlane.f32.xlu0 %v1356
        %v1358 = vpop.xlane.xlu0 %1357
        %v1359 = vsel %vm1355, %v1352, -inf
        %1360 = vmax.xlane.f32.xlu0 %v1359
        %v1361 = vpop.xlane.xlu0 %1360
        %v1362 = vsub.f32 %v1349, %v1358
        %v1363 = vsub.f32 %v1352, %v1361
        %v1364 = vmul.f32 %v1362, 1.442695
        %v1365 = vpow.pop %v1364
        %v1366 = vmul.f32 %v1363, 1.442695
        %v1367 = vpow.pop %v1366
        %v1368 = vsel %vm1355, %v1365, 0.0
        %1369 = vadd.xlane.f32.xlu0 %v1368
        %v1370 = vpop.xlane.xlu0 %1369
        %v1371 = vsel %vm1355, %v1367, 0.0
        %1372 = vadd.xlane.f32.xlu0 %v1371
        %v1373 = vpop.xlane.xlu0 %1372
        %v1374 = vrcp.pop %v1370
        %v1375 = vrcp.pop %v1373
        %v1376 = vmul.f32 %v1365, %v1374
        %v1377 = vmul.f32 %v1367, %v1375
        %v1378 = vpack.c.bf16 %v1377, %v1376
        %1379 = vmatprep.subr.bf16.mxu0 0
        %1380 = vmatpush1.bf16.xpose.msra.mxu0 %v1310
        %1381 = vmatprep.subr.bf16.mxu0 0
        %1382 = vmatpush1.bf16.xpose.msra.mxu0 0
        %1383 = vmatprep.subr.bf16.mxu0 0
        %1384 = vmatpush1.bf16.xpose.msra.mxu0 0
        %1385 = vmatprep.subr.bf16.mxu0 0
        %1386 = vmatpush1.bf16.xpose.msra.mxu0 0
        %1387 = vmatprep.subr.bf16.mxu0 0
        %1388 = vmatpush1.bf16.xpose.msra.mxu0 0
        %1389 = vmatprep.subr.bf16.mxu0 0
        %1390 = vmatpush1.bf16.xpose.msra.mxu0 0
        %1391 = vmatprep.subr.bf16.mxu0 0
        %1392 = vmatpush1.bf16.xpose.msra.mxu0 0
        %1393 = vmatprep.subr.bf16.mxu0 0
        %1394 = vmatpush1.bf16.xpose.msra.mxu0 0
        %1395 = vmatprep.subr.bf16.mxu0 0
        %1396 = vmatpush1.bf16.xpose.msra.mxu0 0
        %1397 = vmatprep.subr.bf16.mxu0 0
        %1398 = vmatpush1.bf16.xpose.msra.mxu0 0
        %1399 = vmatprep.subr.bf16.mxu0 0
        %1400 = vmatpush1.bf16.xpose.msra.mxu0 0
        %1401 = vmatprep.subr.bf16.mxu0 0
        %1402 = vmatpush1.bf16.xpose.msra.mxu0 0
        %1403 = vmatprep.subr.bf16.mxu0 0
        %1404 = vmatpush1.bf16.xpose.msra.mxu0 0
        %1405 = vmatprep.subr.bf16.mxu0 0
        %1406 = vmatpush1.bf16.xpose.msra.mxu0 0
        %1407 = vmatprep.subr.bf16.mxu0 0
        %1408 = vmatpush1.bf16.xpose.msra.mxu0 0
        %1409 = vmatprep.subr.bf16.mxu0 0
        %1410 = vmatpush1.bf16.xpose.msra.mxu0 0
        %1411 = vmatprep.mubr.bf16.mxu0 0
        %1412 = vmatmul.mubr.bf16.gmra.mrb[0].mxu0 %v1309
        %v1413 = vpop.f32.mrb[0].mxu0
        %v1414 = vadd.f32 %v1312, %v1413
        %v1415 = vpop.f32.mrb[0].mxu0
        %v1416 = vpop.f32.mrb[0].mxu0
        %v1417 = vadd.f32 %v1313, %v1416
        %v1418 = vpop.f32.mrb[0].mxu0
        %1419 = vdwg.mxu0
        %v1420 = vsel %vm1355, %v1414, -inf
        %1421 = vmax.xlane.f32.xlu0 %v1420
        %v1422 = vpop.xlane.xlu0 %1421
        %v1423 = vsel %vm1355, %v1417, -inf
        %1424 = vmax.xlane.f32.xlu0 %v1423
        %v1425 = vpop.xlane.xlu0 %1424
        %v1426 = vsub.f32 %v1414, %v1422
        %v1427 = vsub.f32 %v1417, %v1425
        %v1428 = vmul.f32 %v1426, 1.442695
        %v1429 = vpow.pop %v1428
        %v1430 = vmul.f32 %v1427, 1.442695
        %v1431 = vpow.pop %v1430
        %v1432 = vsel %vm1355, %v1429, 0.0
        %1433 = vadd.xlane.f32.xlu0 %v1432
        %v1434 = vpop.xlane.xlu0 %1433
        %v1435 = vsel %vm1355, %v1431, 0.0
        %1436 = vadd.xlane.f32.xlu0 %v1435
        %v1437 = vpop.xlane.xlu0 %1436
        %v1438 = vrcp.pop %v1434
        %v1439 = vrcp.pop %v1437
        %v1440 = vmul.f32 %v1429, %v1438
        %v1441 = vmul.f32 %v1431, %v1439
        %v1442 = vpack.c.bf16 %v1441, %v1440
        %v1444 = vsel %vm1355, %v1442, 0
        %1446 = vmatprep.subr.bf16.mxu0 0
        %1447 = vmatpush1.bf16.msra.mxu0 %v1311
        %1448 = vmatprep.subr.bf16.mxu0 0
        %1449 = vmatpush1.bf16.msra.mxu0 0
        %1450 = vmatprep.subr.bf16.mxu0 0
        %1451 = vmatpush1.bf16.msra.mxu0 0
        %1452 = vmatprep.subr.bf16.mxu0 0
        %1453 = vmatpush1.bf16.msra.mxu0 0
        %1454 = vmatprep.subr.bf16.mxu0 0
        %1455 = vmatpush1.bf16.msra.mxu0 0
        %1456 = vmatprep.subr.bf16.mxu0 0
        %1457 = vmatpush1.bf16.msra.mxu0 0
        %1458 = vmatprep.subr.bf16.mxu0 0
        %1459 = vmatpush1.bf16.msra.mxu0 0
        %1460 = vmatprep.subr.bf16.mxu0 0
        %1461 = vmatpush1.bf16.msra.mxu0 0
        %1462 = vmatprep.subr.bf16.mxu0 0
        %1463 = vmatpush1.bf16.msra.mxu0 0
        %1464 = vmatprep.subr.bf16.mxu0 0
        %1465 = vmatpush1.bf16.msra.mxu0 0
        %1466 = vmatprep.subr.bf16.mxu0 0
        %1467 = vmatpush1.bf16.msra.mxu0 0
        %1468 = vmatprep.subr.bf16.mxu0 0
        %1469 = vmatpush1.bf16.msra.mxu0 0
        %1470 = vmatprep.subr.bf16.mxu0 0
        %1471 = vmatpush1.bf16.msra.mxu0 0
        %1472 = vmatprep.subr.bf16.mxu0 0
        %1473 = vmatpush1.bf16.msra.mxu0 0
        %1474 = vmatprep.subr.bf16.mxu0 0
        %1475 = vmatpush1.bf16.msra.mxu0 0
        %1476 = vmatprep.subr.bf16.mxu0 0
        %1477 = vmatpush1.bf16.msra.mxu0 0
        %1478 = vmatprep.mubr.bf16.mxu0 0
        %1479 = vmatmul.mubr.bf16.gmra.mrb[0].mxu0 %v1444
        %v1480 = vpop.f32.mrb[0].mxu0
        %v1481 = vadd.f32 0.0, %v1480
        %v1482 = vpop.f32.mrb[0].mxu0
        %v1483 = vpop.f32.mrb[0].mxu0
        %v1484 = vadd.f32 0.0, %v1483
        %v1485 = vpop.f32.mrb[0].mxu0
        %1486 = vdwg.mxu0
        %v1488 = vsel %vm1355, %v1378, 0
        %1490 = vmatprep.subr.bf16.mxu0 0
        %1491 = vmatpush1.bf16.msra.mxu0 %v1308
        %1492 = vmatprep.subr.bf16.mxu0 0
        %1493 = vmatpush1.bf16.msra.mxu0 0
        %1494 = vmatprep.subr.bf16.mxu0 0
        %1495 = vmatpush1.bf16.msra.mxu0 0
        %1496 = vmatprep.subr.bf16.mxu0 0
        %1497 = vmatpush1.bf16.msra.mxu0 0
        %1498 = vmatprep.subr.bf16.mxu0 0
        %1499 = vmatpush1.bf16.msra.mxu0 0
        %1500 = vmatprep.subr.bf16.mxu0 0
        %1501 = vmatpush1.bf16.msra.mxu0 0
        %1502 = vmatprep.subr.bf16.mxu0 0
        %1503 = vmatpush1.bf16.msra.mxu0 0
        %1504 = vmatprep.subr.bf16.mxu0 0
        %1505 = vmatpush1.bf16.msra.mxu0 0
        %1506 = vmatprep.subr.bf16.mxu0 0
        %1507 = vmatpush1.bf16.msra.mxu0 0
        %1508 = vmatprep.subr.bf16.mxu0 0
        %1509 = vmatpush1.bf16.msra.mxu0 0
        %1510 = vmatprep.subr.bf16.mxu0 0
        %1511 = vmatpush1.bf16.msra.mxu0 0
        %1512 = vmatprep.subr.bf16.mxu0 0
        %1513 = vmatpush1.bf16.msra.mxu0 0
        %1514 = vmatprep.subr.bf16.mxu0 0
        %1515 = vmatpush1.bf16.msra.mxu0 0
        %1516 = vmatprep.subr.bf16.mxu0 0
        %1517 = vmatpush1.bf16.msra.mxu0 0
        %1518 = vmatprep.subr.bf16.mxu0 0
        %1519 = vmatpush1.bf16.msra.mxu0 0
        %1520 = vmatprep.subr.bf16.mxu0 0
        %1521 = vmatpush1.bf16.msra.mxu0 0
        %1522 = vmatprep.mubr.bf16.mxu0 0
        %1523 = vmatmul.mubr.bf16.gmra.mrb[0].mxu0 %v1488
        %v1524 = vpop.f32.mrb[0].mxu0
        %v1525 = vadd.f32 %v1481, %v1524
        %v1526 = vpop.f32.mrb[0].mxu0
        %v1527 = vpop.f32.mrb[0].mxu0
        %v1528 = vadd.f32 %v1484, %v1527
        %v1529 = vpop.f32.mrb[0].mxu0
        %1530 = vdwg.mxu0
        %v1531 = vld [vmem:[%s784] sm:$0x1]
        %v1533 = vlaneseq
        %v1534 = vshrl.u32 %v1533, 7
        %v1535 = vsub.s32 0, %v1534
        %v1536 = vrot.slane %v1531, %v1535
        %v1538 = vadd.f32 %v1525, %v1536
        %v1539 = vadd.f32 %v1528, %v1536
        %v1540 = vadd.f32 %v1538, %v854
        %v1541 = vadd.f32 %v1539, %v855
        %v1542 = vld [vmem:[%s787] sm:$0x1]
        %v1543 = vld [vmem:[%s790] sm:$0x1]
        %1544 = vadd.xlane.f32.xlu0 %v1540
        %v1545 = vpop.xlane.xlu0 %1544
        %1546 = vadd.xlane.f32.xlu0 %v1541
        %v1547 = vpop.xlane.xlu0 %1546
        %v1548 = vrcp.pop 128.0
        %v1549 = vmul.f32 %v1545, %v1548
        %v1550 = vmul.f32 %v1547, %v1548
        %v1551 = vsub.f32 %v1540, %v1549
        %v1552 = vsub.f32 %v1541, %v1550
        %v1553 = vmul.f32 %v1551, %v1551
        %v1554 = vmul.f32 %v1552, %v1552
        %1555 = vadd.xlane.f32.xlu0 %v1553
        %v1556 = vpop.xlane.xlu0 %1555
        %1557 = vadd.xlane.f32.xlu0 %v1554
        %v1558 = vpop.xlane.xlu0 %1557
        %v1559 = vmul.f32 %v1556, %v1548
        %v1560 = vmul.f32 %v1558, %v1548
        %v1561 = vadd.f32 %v1559, 1e-12
        %v1562 = vadd.f32 %v1560, 1e-12
        %v1563 = vrsqrt.pop %v1561
        %v1564 = vrsqrt.pop %v1562
        %v1565 = vmul.f32 %v1551, %v1563
        %v1566 = vmul.f32 %v1552, %v1564
        %v1568 = vlaneseq
        %v1569 = vshrl.u32 %v1568, 7
        %v1570 = vsub.s32 0, %v1569
        %v1571 = vrot.slane %v1542, %v1570
        %v1573 = vmul.f32 %v1565, %v1571
        %v1574 = vmul.f32 %v1566, %v1571
        %v1576 = vlaneseq
        %v1577 = vshrl.u32 %v1576, 7
        %v1578 = vsub.s32 0, %v1577
        %v1579 = vrot.slane %v1543, %v1578
        %v1581 = vadd.f32 %v1573, %v1579
        %v1582 = vadd.f32 %v1574, %v1579
        %v1583 = vpack.c.bf16 %v1582, %v1581
        %v1584 = vld [vmem:[%s683] sm:$0xff]
        %v1585 = vld [vmem:[%s683 + $0x8] sm:$0xff]
        %v1586 = vld [vmem:[%s683 + $0x10] sm:$0xff]
        %v1587 = vld [vmem:[%s683 + $0x18] sm:$0xff]
        %v1588 = vld [vmem:[%s683 + $0x20] sm:$0xff]
        %v1589 = vld [vmem:[%s683 + $0x28] sm:$0xff]
        %v1590 = vld [vmem:[%s683 + $0x30] sm:$0xff]
        %v1591 = vld [vmem:[%s683 + $0x38] sm:$0xff]
        %v1592 = vld [vmem:[%s683 + $0x40] sm:$0xff]
        %v1593 = vld [vmem:[%s683 + $0x48] sm:$0xff]
        %v1594 = vld [vmem:[%s683 + $0x50] sm:$0xff]
        %v1595 = vld [vmem:[%s683 + $0x58] sm:$0xff]
        %v1596 = vld [vmem:[%s683 + $0x60] sm:$0xff]
        %v1597 = vld [vmem:[%s683 + $0x68] sm:$0xff]
        %v1598 = vld [vmem:[%s683 + $0x70] sm:$0xff]
        %v1599 = vld [vmem:[%s683 + $0x78] sm:$0xff]
        %v1600 = vld [vmem:[%s683 + $0x80] sm:$0xff]
        %v1601 = vld [vmem:[%s683 + $0x88] sm:$0xff]
        %v1602 = vld [vmem:[%s683 + $0x90] sm:$0xff]
        %v1603 = vld [vmem:[%s683 + $0x98] sm:$0xff]
        %v1604 = vld [vmem:[%s683 + $0xa0] sm:$0xff]
        %v1605 = vld [vmem:[%s683 + $0xa8] sm:$0xff]
        %v1606 = vld [vmem:[%s683 + $0xb0] sm:$0xff]
        %v1607 = vld [vmem:[%s683 + $0xb8] sm:$0xff]
        %v1608 = vld [vmem:[%s683 + $0xc0] sm:$0xff]
        %v1609 = vld [vmem:[%s683 + $0xc8] sm:$0xff]
        %v1610 = vld [vmem:[%s683 + $0xd0] sm:$0xff]
        %v1611 = vld [vmem:[%s683 + $0xd8] sm:$0xff]
        %v1612 = vld [vmem:[%s683 + $0xe0] sm:$0xff]
        %v1613 = vld [vmem:[%s683 + $0xe8] sm:$0xff]
        %v1614 = vld [vmem:[%s683 + $0xf0] sm:$0xff]
        %v1615 = vld [vmem:[%s683 + $0xf8] sm:$0xff]
        %v1616 = vld [vmem:[%s794] sm:$0xf]
        %v1618 = vlaneseq
        %v1619 = vshrl.u32 %v1618, 7
        %v1620 = vsub.s32 0, %v1619
        %v1621 = vrot.slane %v1616, %v1620
        %v1622 = vlaneseq
        %v1623 = vshrl.u32 %v1622, 7
        %v1624 = vsub.s32 1, %v1623
        %v1625 = vrot.slane %v1616, %v1624
        %v1626 = vlaneseq
        %v1627 = vshrl.u32 %v1626, 7
        %v1628 = vsub.s32 2, %v1627
        %v1629 = vrot.slane %v1616, %v1628
        %v1630 = vlaneseq
        %v1631 = vshrl.u32 %v1630, 7
        %v1632 = vsub.s32 3, %v1631
        %v1633 = vrot.slane %v1616, %v1632
        %v1670 = vunpack.c.l.b16 %v1584
        %v1671 = vunpack.c.h.b16 %v1584
        %v1672 = vunpack.c.l.b16 %v1585
        %v1673 = vunpack.c.h.b16 %v1585
        %v1674 = vunpack.c.l.b16 %v1586
        %v1675 = vunpack.c.h.b16 %v1586
        %v1676 = vunpack.c.l.b16 %v1587
        %v1677 = vunpack.c.h.b16 %v1587
        %v1678 = vunpack.c.l.b16 %v1588
        %v1679 = vunpack.c.h.b16 %v1588
        %v1680 = vunpack.c.l.b16 %v1589
        %v1681 = vunpack.c.h.b16 %v1589
        %v1682 = vunpack.c.l.b16 %v1590
        %v1683 = vunpack.c.h.b16 %v1590
        %v1684 = vunpack.c.l.b16 %v1591
        %v1685 = vunpack.c.h.b16 %v1591
        %v1686 = vunpack.c.l.b16 %v1592
        %v1687 = vunpack.c.h.b16 %v1592
        %v1688 = vunpack.c.l.b16 %v1593
        %v1689 = vunpack.c.h.b16 %v1593
        %v1690 = vunpack.c.l.b16 %v1594
        %v1691 = vunpack.c.h.b16 %v1594
        %v1692 = vunpack.c.l.b16 %v1595
        %v1693 = vunpack.c.h.b16 %v1595
        %v1694 = vunpack.c.l.b16 %v1596
        %v1695 = vunpack.c.h.b16 %v1596
        %v1696 = vunpack.c.l.b16 %v1597
        %v1697 = vunpack.c.h.b16 %v1597
        %v1698 = vunpack.c.l.b16 %v1598
        %v1699 = vunpack.c.h.b16 %v1598
        %v1700 = vunpack.c.l.b16 %v1599
        %v1701 = vunpack.c.h.b16 %v1599
        %v1702 = vunpack.c.l.b16 %v1600
        %v1703 = vunpack.c.h.b16 %v1600
        %v1704 = vunpack.c.l.b16 %v1601
        %v1705 = vunpack.c.h.b16 %v1601
        %v1706 = vunpack.c.l.b16 %v1602
        %v1707 = vunpack.c.h.b16 %v1602
        %v1708 = vunpack.c.l.b16 %v1603
        %v1709 = vunpack.c.h.b16 %v1603
        %v1710 = vunpack.c.l.b16 %v1604
        %v1711 = vunpack.c.h.b16 %v1604
        %v1712 = vunpack.c.l.b16 %v1605
        %v1713 = vunpack.c.h.b16 %v1605
        %v1714 = vunpack.c.l.b16 %v1606
        %v1715 = vunpack.c.h.b16 %v1606
        %v1716 = vunpack.c.l.b16 %v1607
        %v1717 = vunpack.c.h.b16 %v1607
        %v1718 = vunpack.c.l.b16 %v1608
        %v1719 = vunpack.c.h.b16 %v1608
        %v1720 = vunpack.c.l.b16 %v1609
        %v1721 = vunpack.c.h.b16 %v1609
        %v1722 = vunpack.c.l.b16 %v1610
        %v1723 = vunpack.c.h.b16 %v1610
        %v1724 = vunpack.c.l.b16 %v1611
        %v1725 = vunpack.c.h.b16 %v1611
        %v1726 = vunpack.c.l.b16 %v1612
        %v1727 = vunpack.c.h.b16 %v1612
        %v1728 = vunpack.c.l.b16 %v1613
        %v1729 = vunpack.c.h.b16 %v1613
        %v1730 = vunpack.c.l.b16 %v1614
        %v1731 = vunpack.c.h.b16 %v1614
        %v1732 = vunpack.c.l.b16 %v1615
        %v1733 = vunpack.c.h.b16 %v1615
        %v1734 = vpack.c.b16 %v1674, %v1670
        %v1735 = vpack.c.b16 %v1675, %v1671
        %v1736 = vpack.c.b16 %v1676, %v1672
        %v1737 = vpack.c.b16 %v1677, %v1673
        %v1738 = vpack.c.b16 %v1682, %v1678
        %v1739 = vpack.c.b16 %v1683, %v1679
        %v1740 = vpack.c.b16 %v1684, %v1680
        %v1741 = vpack.c.b16 %v1685, %v1681
        %v1742 = vpack.c.b16 %v1690, %v1686
        %v1743 = vpack.c.b16 %v1691, %v1687
        %v1744 = vpack.c.b16 %v1692, %v1688
        %v1745 = vpack.c.b16 %v1693, %v1689
        %v1746 = vpack.c.b16 %v1698, %v1694
        %v1747 = vpack.c.b16 %v1699, %v1695
        %v1748 = vpack.c.b16 %v1700, %v1696
        %v1749 = vpack.c.b16 %v1701, %v1697
        %v1750 = vpack.c.b16 %v1706, %v1702
        %v1751 = vpack.c.b16 %v1707, %v1703
        %v1752 = vpack.c.b16 %v1708, %v1704
        %v1753 = vpack.c.b16 %v1709, %v1705
        %v1754 = vpack.c.b16 %v1714, %v1710
        %v1755 = vpack.c.b16 %v1715, %v1711
        %v1756 = vpack.c.b16 %v1716, %v1712
        %v1757 = vpack.c.b16 %v1717, %v1713
        %v1758 = vpack.c.b16 %v1722, %v1718
        %v1759 = vpack.c.b16 %v1723, %v1719
        %v1760 = vpack.c.b16 %v1724, %v1720
        %v1761 = vpack.c.b16 %v1725, %v1721
        %v1762 = vpack.c.b16 %v1730, %v1726
        %v1763 = vpack.c.b16 %v1731, %v1727
        %v1764 = vpack.c.b16 %v1732, %v1728
        %v1765 = vpack.c.b16 %v1733, %v1729
        %1798 = vmatprep.subr.bf16.mxu0 %v1735
        %1799 = vmatpush1.bf16.msra.mxu0 %v1734
        %1800 = vmatprep.subr.bf16.mxu0 %v1739
        %1801 = vmatpush1.bf16.msra.mxu0 %v1738
        %1802 = vmatprep.subr.bf16.mxu0 %v1743
        %1803 = vmatpush1.bf16.msra.mxu0 %v1742
        %1804 = vmatprep.subr.bf16.mxu0 %v1747
        %1805 = vmatpush1.bf16.msra.mxu0 %v1746
        %1806 = vmatprep.subr.bf16.mxu0 %v1751
        %1807 = vmatpush1.bf16.msra.mxu0 %v1750
        %1808 = vmatprep.subr.bf16.mxu0 %v1755
        %1809 = vmatpush1.bf16.msra.mxu0 %v1754
        %1810 = vmatprep.subr.bf16.mxu0 %v1759
        %1811 = vmatpush1.bf16.msra.mxu0 %v1758
        %1812 = vmatprep.subr.bf16.mxu0 %v1763
        %1813 = vmatpush1.bf16.msra.mxu0 %v1762
        %1814 = vmatprep.subr.bf16.mxu0 0
        %1815 = vmatpush1.bf16.msra.mxu0 0
        %1816 = vmatprep.subr.bf16.mxu0 0
        %1817 = vmatpush1.bf16.msra.mxu0 0
        %1818 = vmatprep.subr.bf16.mxu0 0
        %1819 = vmatpush1.bf16.msra.mxu0 0
        %1820 = vmatprep.subr.bf16.mxu0 0
        %1821 = vmatpush1.bf16.msra.mxu0 0
        %1822 = vmatprep.subr.bf16.mxu0 0
        %1823 = vmatpush1.bf16.msra.mxu0 0
        %1824 = vmatprep.subr.bf16.mxu0 0
        %1825 = vmatpush1.bf16.msra.mxu0 0
        %1826 = vmatprep.subr.bf16.mxu0 0
        %1827 = vmatpush1.bf16.msra.mxu0 0
        %1828 = vmatprep.subr.bf16.mxu0 0
        %1829 = vmatpush1.bf16.msra.mxu0 0
        %1830 = vmatprep.mubr.bf16.mxu0 0
        %1831 = vmatmul.mubr.bf16.gmra.mrb[0].mxu0 %v1583
        %v1832 = vpop.f32.mrb[0].mxu0
        %v1833 = vadd.f32 %v1621, %v1832
        %v1834 = vpop.f32.mrb[0].mxu0
        %v1835 = vadd.f32 %v1625, %v1834
        %v1836 = vpop.f32.mrb[0].mxu0
        %v1837 = vadd.f32 %v1621, %v1836
        %v1838 = vpop.f32.mrb[0].mxu0
        %v1839 = vadd.f32 %v1625, %v1838
        %1840 = vdwg.mxu0
        %1841 = vmatprep.subr.bf16.mxu0 %v1737
        %1842 = vmatpush1.bf16.msra.mxu0 %v1736
        %1843 = vmatprep.subr.bf16.mxu0 %v1741
        %1844 = vmatpush1.bf16.msra.mxu0 %v1740
        %1845 = vmatprep.subr.bf16.mxu0 %v1745
        %1846 = vmatpush1.bf16.msra.mxu0 %v1744
        %1847 = vmatprep.subr.bf16.mxu0 %v1749
        %1848 = vmatpush1.bf16.msra.mxu0 %v1748
        %1849 = vmatprep.subr.bf16.mxu0 %v1753
        %1850 = vmatpush1.bf16.msra.mxu0 %v1752
        %1851 = vmatprep.subr.bf16.mxu0 %v1757
        %1852 = vmatpush1.bf16.msra.mxu0 %v1756
        %1853 = vmatprep.subr.bf16.mxu0 %v1761
        %1854 = vmatpush1.bf16.msra.mxu0 %v1760
        %1855 = vmatprep.subr.bf16.mxu0 %v1765
        %1856 = vmatpush1.bf16.msra.mxu0 %v1764
        %1857 = vmatprep.subr.bf16.mxu0 0
        %1858 = vmatpush1.bf16.msra.mxu0 0
        %1859 = vmatprep.subr.bf16.mxu0 0
        %1860 = vmatpush1.bf16.msra.mxu0 0
        %1861 = vmatprep.subr.bf16.mxu0 0
        %1862 = vmatpush1.bf16.msra.mxu0 0
        %1863 = vmatprep.subr.bf16.mxu0 0
        %1864 = vmatpush1.bf16.msra.mxu0 0
        %1865 = vmatprep.subr.bf16.mxu0 0
        %1866 = vmatpush1.bf16.msra.mxu0 0
        %1867 = vmatprep.subr.bf16.mxu0 0
        %1868 = vmatpush1.bf16.msra.mxu0 0
        %1869 = vmatprep.subr.bf16.mxu0 0
        %1870 = vmatpush1.bf16.msra.mxu0 0
        %1871 = vmatprep.subr.bf16.mxu0 0
        %1872 = vmatpush1.bf16.msra.mxu0 0
        %1873 = vmatprep.mubr.bf16.mxu0 0
        %1874 = vmatmul.mubr.bf16.gmra.mrb[0].mxu0 %v1583
        %v1875 = vpop.f32.mrb[0].mxu0
        %v1876 = vadd.f32 %v1629, %v1875
        %v1877 = vpop.f32.mrb[0].mxu0
        %v1878 = vadd.f32 %v1633, %v1877
        %v1879 = vpop.f32.mrb[0].mxu0
        %v1880 = vadd.f32 %v1629, %v1879
        %v1881 = vpop.f32.mrb[0].mxu0
        %v1882 = vadd.f32 %v1633, %v1881
        %1883 = vdwg.mxu0
        %v1884 = vmul.f32 %v1833, 0.5
        %v1885 = vmul.f32 %v1835, 0.5
        %v1886 = vmul.f32 %v1876, 0.5
        %v1887 = vmul.f32 %v1878, 0.5
        %v1888 = vmul.f32 %v1837, 0.5
        %v1889 = vmul.f32 %v1839, 0.5
        %v1890 = vmul.f32 %v1880, 0.5
        %v1891 = vmul.f32 %v1882, 0.5
        %v1892 = vmul.f32 %v1833, 0.044715
        %v1893 = vmul.f32 %v1835, 0.044715
        %v1894 = vmul.f32 %v1876, 0.044715
        %v1895 = vmul.f32 %v1878, 0.044715
        %v1896 = vmul.f32 %v1837, 0.044715
        %v1897 = vmul.f32 %v1839, 0.044715
        %v1898 = vmul.f32 %v1880, 0.044715
        %v1899 = vmul.f32 %v1882, 0.044715
        %v1900 = vmul.f32 %v1892, %v1833
        %v1901 = vmul.f32 %v1893, %v1835
        %v1902 = vmul.f32 %v1894, %v1876
        %v1903 = vmul.f32 %v1895, %v1878
        %v1904 = vmul.f32 %v1896, %v1837
        %v1905 = vmul.f32 %v1897, %v1839
        %v1906 = vmul.f32 %v1898, %v1880
        %v1907 = vmul.f32 %v1899, %v1882
        %v1908 = vmul.f32 %v1900, %v1833
        %v1909 = vmul.f32 %v1901, %v1835
        %v1910 = vmul.f32 %v1902, %v1876
        %v1911 = vmul.f32 %v1903, %v1878
        %v1912 = vmul.f32 %v1904, %v1837
        %v1913 = vmul.f32 %v1905, %v1839
        %v1914 = vmul.f32 %v1906, %v1880
        %v1915 = vmul.f32 %v1907, %v1882
        %v1916 = vadd.f32 %v1833, %v1908
        %v1917 = vadd.f32 %v1835, %v1909
        %v1918 = vadd.f32 %v1876, %v1910
        %v1919 = vadd.f32 %v1878, %v1911
        %v1920 = vadd.f32 %v1837, %v1912
        %v1921 = vadd.f32 %v1839, %v1913
        %v1922 = vadd.f32 %v1880, %v1914
        %v1923 = vadd.f32 %v1882, %v1915
        %v1924 = vmul.f32 %v1916, 0.7978846
        %v1925 = vmul.f32 %v1917, 0.7978846
        %v1926 = vmul.f32 %v1918, 0.7978846
        %v1927 = vmul.f32 %v1919, 0.7978846
        %v1928 = vmul.f32 %v1920, 0.7978846
        %v1929 = vmul.f32 %v1921, 0.7978846
        %v1930 = vmul.f32 %v1922, 0.7978846
        %v1931 = vmul.f32 %v1923, 0.7978846
        %v1932 = vtanh.pop %v1924
        %v1933 = vtanh.pop %v1925
        %v1934 = vtanh.pop %v1926
        %v1935 = vtanh.pop %v1927
        %v1936 = vtanh.pop %v1928
        %v1937 = vtanh.pop %v1929
        %v1938 = vtanh.pop %v1930
        %v1939 = vtanh.pop %v1931
        %v1940 = vadd.f32 %v1932, 1.0
        %v1941 = vadd.f32 %v1933, 1.0
        %v1942 = vadd.f32 %v1934, 1.0
        %v1943 = vadd.f32 %v1935, 1.0
        %v1944 = vadd.f32 %v1936, 1.0
        %v1945 = vadd.f32 %v1937, 1.0
        %v1946 = vadd.f32 %v1938, 1.0
        %v1947 = vadd.f32 %v1939, 1.0
        %v1948 = vmul.f32 %v1884, %v1940
        %v1949 = vmul.f32 %v1885, %v1941
        %v1950 = vmul.f32 %v1886, %v1942
        %v1951 = vmul.f32 %v1887, %v1943
        %v1952 = vmul.f32 %v1888, %v1944
        %v1953 = vmul.f32 %v1889, %v1945
        %v1954 = vmul.f32 %v1890, %v1946
        %v1955 = vmul.f32 %v1891, %v1947
        %v1956 = vpack.c.bf16 %v1952, %v1948
        %v1957 = vpack.c.bf16 %v1953, %v1949
        %v1958 = vpack.c.bf16 %v1954, %v1950
        %v1959 = vpack.c.bf16 %v1955, %v1951
        %v1960 = vld [vmem:[%s692] sm:$0xf]
        %v1961 = vld [vmem:[%s692 + $0x4] sm:$0xf]
        %v1962 = vld [vmem:[%s692 + $0x8] sm:$0xf]
        %v1963 = vld [vmem:[%s692 + $0xc] sm:$0xf]
        %v1964 = vld [vmem:[%s692 + $0x10] sm:$0xf]
        %v1965 = vld [vmem:[%s692 + $0x14] sm:$0xf]
        %v1966 = vld [vmem:[%s692 + $0x18] sm:$0xf]
        %v1967 = vld [vmem:[%s692 + $0x1c] sm:$0xf]
        %v1968 = vld [vmem:[%s692 + $0x20] sm:$0xf]
        %v1969 = vld [vmem:[%s692 + $0x24] sm:$0xf]
        %v1970 = vld [vmem:[%s692 + $0x28] sm:$0xf]
        %v1971 = vld [vmem:[%s692 + $0x2c] sm:$0xf]
        %v1972 = vld [vmem:[%s692 + $0x30] sm:$0xf]
        %v1973 = vld [vmem:[%s692 + $0x34] sm:$0xf]
        %v1974 = vld [vmem:[%s692 + $0x38] sm:$0xf]
        %v1975 = vld [vmem:[%s692 + $0x3c] sm:$0xf]
        %v1976 = vld [vmem:[%s692 + $0x40] sm:$0xf]
        %v1977 = vld [vmem:[%s692 + $0x44] sm:$0xf]
        %v1978 = vld [vmem:[%s692 + $0x48] sm:$0xf]
        %v1979 = vld [vmem:[%s692 + $0x4c] sm:$0xf]
        %v1980 = vld [vmem:[%s692 + $0x50] sm:$0xf]
        %v1981 = vld [vmem:[%s692 + $0x54] sm:$0xf]
        %v1982 = vld [vmem:[%s692 + $0x58] sm:$0xf]
        %v1983 = vld [vmem:[%s692 + $0x5c] sm:$0xf]
        %v1984 = vld [vmem:[%s692 + $0x60] sm:$0xf]
        %v1985 = vld [vmem:[%s692 + $0x64] sm:$0xf]
        %v1986 = vld [vmem:[%s692 + $0x68] sm:$0xf]
        %v1987 = vld [vmem:[%s692 + $0x6c] sm:$0xf]
        %v1988 = vld [vmem:[%s692 + $0x70] sm:$0xf]
        %v1989 = vld [vmem:[%s692 + $0x74] sm:$0xf]
        %v1990 = vld [vmem:[%s692 + $0x78] sm:$0xf]
        %v1991 = vld [vmem:[%s692 + $0x7c] sm:$0xf]
        %v1992 = vld [vmem:[%s692 + $0x80] sm:$0xf]
        %v1993 = vld [vmem:[%s692 + $0x84] sm:$0xf]
        %v1994 = vld [vmem:[%s692 + $0x88] sm:$0xf]
        %v1995 = vld [vmem:[%s692 + $0x8c] sm:$0xf]
        %v1996 = vld [vmem:[%s692 + $0x90] sm:$0xf]
        %v1997 = vld [vmem:[%s692 + $0x94] sm:$0xf]
        %v1998 = vld [vmem:[%s692 + $0x98] sm:$0xf]
        %v1999 = vld [vmem:[%s692 + $0x9c] sm:$0xf]
        %v2000 = vld [vmem:[%s692 + $0xa0] sm:$0xf]
        %v2001 = vld [vmem:[%s692 + $0xa4] sm:$0xf]
        %v2002 = vld [vmem:[%s692 + $0xa8] sm:$0xf]
        %v2003 = vld [vmem:[%s692 + $0xac] sm:$0xf]
        %v2004 = vld [vmem:[%s692 + $0xb0] sm:$0xf]
        %v2005 = vld [vmem:[%s692 + $0xb4] sm:$0xf]
        %v2006 = vld [vmem:[%s692 + $0xb8] sm:$0xf]
        %v2007 = vld [vmem:[%s692 + $0xbc] sm:$0xf]
        %v2008 = vld [vmem:[%s692 + $0xc0] sm:$0xf]
        %v2009 = vld [vmem:[%s692 + $0xc4] sm:$0xf]
        %v2010 = vld [vmem:[%s692 + $0xc8] sm:$0xf]
        %v2011 = vld [vmem:[%s692 + $0xcc] sm:$0xf]
        %v2012 = vld [vmem:[%s692 + $0xd0] sm:$0xf]
        %v2013 = vld [vmem:[%s692 + $0xd4] sm:$0xf]
        %v2014 = vld [vmem:[%s692 + $0xd8] sm:$0xf]
        %v2015 = vld [vmem:[%s692 + $0xdc] sm:$0xf]
        %v2016 = vld [vmem:[%s692 + $0xe0] sm:$0xf]
        %v2017 = vld [vmem:[%s692 + $0xe4] sm:$0xf]
        %v2018 = vld [vmem:[%s692 + $0xe8] sm:$0xf]
        %v2019 = vld [vmem:[%s692 + $0xec] sm:$0xf]
        %v2020 = vld [vmem:[%s692 + $0xf0] sm:$0xf]
        %v2021 = vld [vmem:[%s692 + $0xf4] sm:$0xf]
        %v2022 = vld [vmem:[%s692 + $0xf8] sm:$0xf]
        %v2023 = vld [vmem:[%s692 + $0xfc] sm:$0xf]
        %v2024 = vld [vmem:[%s797] sm:$0x1]
        %v2026 = vlaneseq
        %v2027 = vshrl.u32 %v2026, 7
        %v2028 = vsub.s32 0, %v2027
        %v2029 = vrot.slane %v2024, %v2028
        %v2095 = vunpack.c.l.b16 %v1960
        %v2096 = vunpack.c.l.b16 %v1961
        %v2097 = vunpack.c.l.b16 %v1962
        %v2098 = vunpack.c.l.b16 %v1963
        %v2099 = vunpack.c.l.b16 %v1964
        %v2100 = vunpack.c.l.b16 %v1965
        %v2101 = vunpack.c.l.b16 %v1966
        %v2102 = vunpack.c.l.b16 %v1967
        %v2103 = vunpack.c.l.b16 %v1968
        %v2104 = vunpack.c.l.b16 %v1969
        %v2105 = vunpack.c.l.b16 %v1970
        %v2106 = vunpack.c.l.b16 %v1971
        %v2107 = vunpack.c.l.b16 %v1972
        %v2108 = vunpack.c.l.b16 %v1973
        %v2109 = vunpack.c.l.b16 %v1974
        %v2110 = vunpack.c.l.b16 %v1975
        %v2111 = vunpack.c.l.b16 %v1976
        %v2112 = vunpack.c.l.b16 %v1977
        %v2113 = vunpack.c.l.b16 %v1978
        %v2114 = vunpack.c.l.b16 %v1979
        %v2115 = vunpack.c.l.b16 %v1980
        %v2116 = vunpack.c.l.b16 %v1981
        %v2117 = vunpack.c.l.b16 %v1982
        %v2118 = vunpack.c.l.b16 %v1983
        %v2119 = vunpack.c.l.b16 %v1984
        %v2120 = vunpack.c.l.b16 %v1985
        %v2121 = vunpack.c.l.b16 %v1986
        %v2122 = vunpack.c.l.b16 %v1987
        %v2123 = vunpack.c.l.b16 %v1988
        %v2124 = vunpack.c.l.b16 %v1989
        %v2125 = vunpack.c.l.b16 %v1990
        %v2126 = vunpack.c.l.b16 %v1991
        %v2127 = vunpack.c.l.b16 %v1992
        %v2128 = vunpack.c.l.b16 %v1993
        %v2129 = vunpack.c.l.b16 %v1994
        %v2130 = vunpack.c.l.b16 %v1995
        %v2131 = vunpack.c.l.b16 %v1996
        %v2132 = vunpack.c.l.b16 %v1997
        %v2133 = vunpack.c.l.b16 %v1998
        %v2134 = vunpack.c.l.b16 %v1999
        %v2135 = vunpack.c.l.b16 %v2000
        %v2136 = vunpack.c.l.b16 %v2001
        %v2137 = vunpack.c.l.b16 %v2002
        %v2138 = vunpack.c.l.b16 %v2003
        %v2139 = vunpack.c.l.b16 %v2004
        %v2140 = vunpack.c.l.b16 %v2005
        %v2141 = vunpack.c.l.b16 %v2006
        %v2142 = vunpack.c.l.b16 %v2007
        %v2143 = vunpack.c.l.b16 %v2008
        %v2144 = vunpack.c.l.b16 %v2009
        %v2145 = vunpack.c.l.b16 %v2010
        %v2146 = vunpack.c.l.b16 %v2011
        %v2147 = vunpack.c.l.b16 %v2012
        %v2148 = vunpack.c.l.b16 %v2013
        %v2149 = vunpack.c.l.b16 %v2014
        %v2150 = vunpack.c.l.b16 %v2015
        %v2151 = vunpack.c.l.b16 %v2016
        %v2152 = vunpack.c.l.b16 %v2017
        %v2153 = vunpack.c.l.b16 %v2018
        %v2154 = vunpack.c.l.b16 %v2019
        %v2155 = vunpack.c.l.b16 %v2020
        %v2156 = vunpack.c.l.b16 %v2021
        %v2157 = vunpack.c.l.b16 %v2022
        %v2158 = vunpack.c.l.b16 %v2023
        %v2159 = vpack.c.b16 %v2096, %v2095
        %v2160 = vpack.c.b16 %v2098, %v2097
        %v2161 = vpack.c.b16 %v2100, %v2099
        %v2162 = vpack.c.b16 %v2102, %v2101
        %v2163 = vpack.c.b16 %v2104, %v2103
        %v2164 = vpack.c.b16 %v2106, %v2105
        %v2165 = vpack.c.b16 %v2108, %v2107
        %v2166 = vpack.c.b16 %v2110, %v2109
        %v2167 = vpack.c.b16 %v2112, %v2111
        %v2168 = vpack.c.b16 %v2114, %v2113
        %v2169 = vpack.c.b16 %v2116, %v2115
        %v2170 = vpack.c.b16 %v2118, %v2117
        %v2171 = vpack.c.b16 %v2120, %v2119
        %v2172 = vpack.c.b16 %v2122, %v2121
        %v2173 = vpack.c.b16 %v2124, %v2123
        %v2174 = vpack.c.b16 %v2126, %v2125
        %v2175 = vpack.c.b16 %v2128, %v2127
        %v2176 = vpack.c.b16 %v2130, %v2129
        %v2177 = vpack.c.b16 %v2132, %v2131
        %v2178 = vpack.c.b16 %v2134, %v2133
        %v2179 = vpack.c.b16 %v2136, %v2135
        %v2180 = vpack.c.b16 %v2138, %v2137
        %v2181 = vpack.c.b16 %v2140, %v2139
        %v2182 = vpack.c.b16 %v2142, %v2141
        %v2183 = vpack.c.b16 %v2144, %v2143
        %v2184 = vpack.c.b16 %v2146, %v2145
        %v2185 = vpack.c.b16 %v2148, %v2147
        %v2186 = vpack.c.b16 %v2150, %v2149
        %v2187 = vpack.c.b16 %v2152, %v2151
        %v2188 = vpack.c.b16 %v2154, %v2153
        %v2189 = vpack.c.b16 %v2156, %v2155
        %v2190 = vpack.c.b16 %v2158, %v2157
        %2223 = vmatprep.subr.bf16.mxu0 0
        %2224 = vmatpush1.bf16.msra.mxu0 %v2159
        %2225 = vmatprep.subr.bf16.mxu0 0
        %2226 = vmatpush1.bf16.msra.mxu0 %v2160
        %2227 = vmatprep.subr.bf16.mxu0 0
        %2228 = vmatpush1.bf16.msra.mxu0 %v2161
        %2229 = vmatprep.subr.bf16.mxu0 0
        %2230 = vmatpush1.bf16.msra.mxu0 %v2162
        %2231 = vmatprep.subr.bf16.mxu0 0
        %2232 = vmatpush1.bf16.msra.mxu0 %v2163
        %2233 = vmatprep.subr.bf16.mxu0 0
        %2234 = vmatpush1.bf16.msra.mxu0 %v2164
        %2235 = vmatprep.subr.bf16.mxu0 0
        %2236 = vmatpush1.bf16.msra.mxu0 %v2165
        %2237 = vmatprep.subr.bf16.mxu0 0
        %2238 = vmatpush1.bf16.msra.mxu0 %v2166
        %2239 = vmatprep.subr.bf16.mxu0 0
        %2240 = vmatpush1.bf16.msra.mxu0 %v2167
        %2241 = vmatprep.subr.bf16.mxu0 0
        %2242 = vmatpush1.bf16.msra.mxu0 %v2168
        %2243 = vmatprep.subr.bf16.mxu0 0
        %2244 = vmatpush1.bf16.msra.mxu0 %v2169
        %2245 = vmatprep.subr.bf16.mxu0 0
        %2246 = vmatpush1.bf16.msra.mxu0 %v2170
        %2247 = vmatprep.subr.bf16.mxu0 0
        %2248 = vmatpush1.bf16.msra.mxu0 %v2171
        %2249 = vmatprep.subr.bf16.mxu0 0
        %2250 = vmatpush1.bf16.msra.mxu0 %v2172
        %2251 = vmatprep.subr.bf16.mxu0 0
        %2252 = vmatpush1.bf16.msra.mxu0 %v2173
        %2253 = vmatprep.subr.bf16.mxu0 0
        %2254 = vmatpush1.bf16.msra.mxu0 %v2174
        %2255 = vmatprep.mubr.bf16.mxu0 %v1957
        %2256 = vmatmul.mubr.bf16.gmra.mrb[0].mxu0 %v1956
        %v2257 = vpop.f32.mrb[0].mxu0
        %v2258 = vadd.f32 %v2029, %v2257
        %v2259 = vpop.f32.mrb[0].mxu0
        %v2260 = vpop.f32.mrb[0].mxu0
        %v2261 = vadd.f32 %v2029, %v2260
        %v2262 = vpop.f32.mrb[0].mxu0
        %2263 = vdwg.mxu0
        %2264 = vmatprep.subr.bf16.mxu0 0
        %2265 = vmatpush1.bf16.msra.mxu0 %v2175
        %2266 = vmatprep.subr.bf16.mxu0 0
        %2267 = vmatpush1.bf16.msra.mxu0 %v2176
        %2268 = vmatprep.subr.bf16.mxu0 0
        %2269 = vmatpush1.bf16.msra.mxu0 %v2177
        %2270 = vmatprep.subr.bf16.mxu0 0
        %2271 = vmatpush1.bf16.msra.mxu0 %v2178
        %2272 = vmatprep.subr.bf16.mxu0 0
        %2273 = vmatpush1.bf16.msra.mxu0 %v2179
        %2274 = vmatprep.subr.bf16.mxu0 0
        %2275 = vmatpush1.bf16.msra.mxu0 %v2180
        %2276 = vmatprep.subr.bf16.mxu0 0
        %2277 = vmatpush1.bf16.msra.mxu0 %v2181
        %2278 = vmatprep.subr.bf16.mxu0 0
        %2279 = vmatpush1.bf16.msra.mxu0 %v2182
        %2280 = vmatprep.subr.bf16.mxu0 0
        %2281 = vmatpush1.bf16.msra.mxu0 %v2183
        %2282 = vmatprep.subr.bf16.mxu0 0
        %2283 = vmatpush1.bf16.msra.mxu0 %v2184
        %2284 = vmatprep.subr.bf16.mxu0 0
        %2285 = vmatpush1.bf16.msra.mxu0 %v2185
        %2286 = vmatprep.subr.bf16.mxu0 0
        %2287 = vmatpush1.bf16.msra.mxu0 %v2186
        %2288 = vmatprep.subr.bf16.mxu0 0
        %2289 = vmatpush1.bf16.msra.mxu0 %v2187
        %2290 = vmatprep.subr.bf16.mxu0 0
        %2291 = vmatpush1.bf16.msra.mxu0 %v2188
        %2292 = vmatprep.subr.bf16.mxu0 0
        %2293 = vmatpush1.bf16.msra.mxu0 %v2189
        %2294 = vmatprep.subr.bf16.mxu0 0
        %2295 = vmatpush1.bf16.msra.mxu0 %v2190
        %2296 = vmatprep.mubr.bf16.mxu0 %v1959
        %2297 = vmatmul.mubr.bf16.gmra.mrb[0].mxu0 %v1958
        %v2298 = vpop.f32.mrb[0].mxu0
        %v2299 = vadd.f32 %v2258, %v2298
        %v2300 = vpop.f32.mrb[0].mxu0
        %v2301 = vpop.f32.mrb[0].mxu0
        %v2302 = vadd.f32 %v2261, %v2301
        %v2303 = vpop.f32.mrb[0].mxu0
        %2304 = vdwg.mxu0
        %v2305 = vadd.f32 %v2299, %v1581
        %v2306 = vadd.f32 %v2302, %v1582
        %v2307 = vld [vmem:[%s800] sm:$0x1]
        %v2308 = vld [vmem:[%s803] sm:$0x1]
        %2309 = vadd.xlane.f32.xlu0 %v2305
        %v2310 = vpop.xlane.xlu0 %2309
        %2311 = vadd.xlane.f32.xlu0 %v2306
        %v2312 = vpop.xlane.xlu0 %2311
        %v2313 = vmul.f32 %v2310, %v1548
        %v2314 = vmul.f32 %v2312, %v1548
        %v2315 = vsub.f32 %v2305, %v2313
        %v2316 = vsub.f32 %v2306, %v2314
        %v2317 = vmul.f32 %v2315, %v2315
        %v2318 = vmul.f32 %v2316, %v2316
        %2319 = vadd.xlane.f32.xlu0 %v2317
        %v2320 = vpop.xlane.xlu0 %2319
        %2321 = vadd.xlane.f32.xlu0 %v2318
        %v2322 = vpop.xlane.xlu0 %2321
        %v2323 = vmul.f32 %v2320, %v1548
        %v2324 = vmul.f32 %v2322, %v1548
        %v2325 = vadd.f32 %v2323, 1e-12
        %v2326 = vadd.f32 %v2324, 1e-12
        %v2327 = vrsqrt.pop %v2325
        %v2328 = vrsqrt.pop %v2326
        %v2329 = vmul.f32 %v2315, %v2327
        %v2330 = vmul.f32 %v2316, %v2328
        %v2332 = vlaneseq
        %v2333 = vshrl.u32 %v2332, 7
        %v2334 = vsub.s32 0, %v2333
        %v2335 = vrot.slane %v2307, %v2334
        %v2337 = vmul.f32 %v2329, %v2335
        %v2338 = vmul.f32 %v2330, %v2335
        %v2340 = vlaneseq
        %v2341 = vshrl.u32 %v2340, 7
        %v2342 = vsub.s32 0, %v2341
        %v2343 = vrot.slane %v2308, %v2342
        %v2345 = vadd.f32 %v2337, %v2343
        %v2346 = vadd.f32 %v2338, %v2343
        %2347 = vst [vmem:[#allocation2] sm:$0xff] %v2345
        %2348 = vst [vmem:[#allocation2 + $0x8] sm:$0xff] %v2346
        %p2349 = scmp.eq.s32.totalorder %s37, 1
        // Predicated region
        $region113: #{disaster_net_forward.1} parent=95 // pred_check
          %p2350 = pneg %p2349
        $region114: #{disaster_net_forward.1} parent=95 // pred_check_branch
          %2352 = sbr.rel (%p2350) target = $region116
        $region115: #{disaster_net_forward.1} parent=95 // pred_region
          %v2354 = vrot.slane %v2346, 7
          %vm2356 = vcmask 1040384
          %v2357 = vsel %vm2356, %v2345, %v2354
          %v2358 = vpack.c.bf16 %v2357, %v2357
          %v2359 = vld [vmem:[%s15] sm:$0xf]
          %v2360 = vld [vmem:[%s15 + $0x4] sm:$0xf]
          %v2361 = vld [vmem:[%s15 + $0x8] sm:$0xf]
          %v2362 = vld [vmem:[%s15 + $0xc] sm:$0xf]
          %v2363 = vld [vmem:[%s15 + $0x10] sm:$0xf]
          %v2364 = vld [vmem:[%s15 + $0x14] sm:$0xf]
          %v2365 = vld [vmem:[%s15 + $0x18] sm:$0xf]
          %v2366 = vld [vmem:[%s15 + $0x1c] sm:$0xf]
          %v2367 = vld [vmem:[%s15 + $0x20] sm:$0xf]
          %v2368 = vld [vmem:[%s15 + $0x24] sm:$0xf]
          %v2369 = vld [vmem:[%s15 + $0x28] sm:$0xf]
          %v2370 = vld [vmem:[%s15 + $0x2c] sm:$0xf]
          %v2371 = vld [vmem:[%s15 + $0x30] sm:$0xf]
          %v2372 = vld [vmem:[%s15 + $0x34] sm:$0xf]
          %v2373 = vld [vmem:[%s15 + $0x38] sm:$0xf]
          %v2374 = vld [vmem:[%s15 + $0x3c] sm:$0xf]
          %v2375 = vld [vmem:[%s16] sm:$0x1]
          %v2377 = vlaneseq
          %v2378 = vshrl.u32 %v2377, 7
          %v2379 = vsub.s32 0, %v2378
          %v2380 = vrot.slane %v2375, %v2379
          %v2398 = vunpack.c.l.b16 %v2359
          %v2399 = vunpack.c.l.b16 %v2360
          %v2400 = vunpack.c.l.b16 %v2361
          %v2401 = vunpack.c.l.b16 %v2362
          %v2402 = vunpack.c.l.b16 %v2363
          %v2403 = vunpack.c.l.b16 %v2364
          %v2404 = vunpack.c.l.b16 %v2365
          %v2405 = vunpack.c.l.b16 %v2366
          %v2406 = vunpack.c.l.b16 %v2367
          %v2407 = vunpack.c.l.b16 %v2368
          %v2408 = vunpack.c.l.b16 %v2369
          %v2409 = vunpack.c.l.b16 %v2370
          %v2410 = vunpack.c.l.b16 %v2371
          %v2411 = vunpack.c.l.b16 %v2372
          %v2412 = vunpack.c.l.b16 %v2373
          %v2413 = vunpack.c.l.b16 %v2374
          %v2414 = vpack.c.b16 %v2399, %v2398
          %v2415 = vpack.c.b16 %v2401, %v2400
          %v2416 = vpack.c.b16 %v2403, %v2402
          %v2417 = vpack.c.b16 %v2405, %v2404
          %v2418 = vpack.c.b16 %v2407, %v2406
          %v2419 = vpack.c.b16 %v2409, %v2408
          %v2420 = vpack.c.b16 %v2411, %v2410
          %v2421 = vpack.c.b16 %v2413, %v2412
          %2430 = vmatprep.subr.bf16.mxu0 0
          %2431 = vmatpush1.bf16.msra.mxu0 %v2414
          %2432 = vmatprep.subr.bf16.mxu0 0
          %2433 = vmatpush1.bf16.msra.mxu0 %v2415
          %2434 = vmatprep.subr.bf16.mxu0 0
          %2435 = vmatpush1.bf16.msra.mxu0 %v2416
          %2436 = vmatprep.subr.bf16.mxu0 0
          %2437 = vmatpush1.bf16.msra.mxu0 %v2417
          %2438 = vmatprep.subr.bf16.mxu0 0
          %2439 = vmatpush1.bf16.msra.mxu0 %v2418
          %2440 = vmatprep.subr.bf16.mxu0 0
          %2441 = vmatpush1.bf16.msra.mxu0 %v2419
          %2442 = vmatprep.subr.bf16.mxu0 0
          %2443 = vmatpush1.bf16.msra.mxu0 %v2420
          %2444 = vmatprep.subr.bf16.mxu0 0
          %2445 = vmatpush1.bf16.msra.mxu0 %v2421
          %2446 = vmatprep.subr.bf16.mxu0 0
          %2447 = vmatpush1.bf16.msra.mxu0 0
          %2448 = vmatprep.subr.bf16.mxu0 0
          %2449 = vmatpush1.bf16.msra.mxu0 0
          %2450 = vmatprep.subr.bf16.mxu0 0
          %2451 = vmatpush1.bf16.msra.mxu0 0
          %2452 = vmatprep.subr.bf16.mxu0 0
          %2453 = vmatpush1.bf16.msra.mxu0 0
          %2454 = vmatprep.subr.bf16.mxu0 0
          %2455 = vmatpush1.bf16.msra.mxu0 0
          %2456 = vmatprep.subr.bf16.mxu0 0
          %2457 = vmatpush1.bf16.msra.mxu0 0
          %2458 = vmatprep.subr.bf16.mxu0 0
          %2459 = vmatpush1.bf16.msra.mxu0 0
          %2460 = vmatprep.subr.bf16.mxu0 0
          %2461 = vmatpush1.bf16.msra.mxu0 0
          %2462 = vmatprep.mubr.bf16.mxu0 0
          %2463 = vmatmul.mubr.bf16.gmra.mrb[0].mxu0 %v2358
          %v2464 = vpop.f32.mrb[0].mxu0
          %v2465 = vadd.f32 %v2380, %v2464
          %v2466 = vpop.f32.mrb[0].mxu0
          %v2467 = vpop.f32.mrb[0].mxu0
          %v2468 = vpop.f32.mrb[0].mxu0
          %2469 = vdwg.mxu0
          %v2470 = vtanh.pop %v2465
          %v2471 = vpack.c.bf16 %v2470, %v2470
          %v2472 = vld [vmem:[%s17] sm:$0xf]
          %v2473 = vld [vmem:[%s17 + $0x4] sm:$0xf]
          %v2474 = vld [vmem:[%s17 + $0x8] sm:$0xf]
          %v2475 = vld [vmem:[%s17 + $0xc] sm:$0xf]
          %v2476 = vld [vmem:[%s17 + $0x10] sm:$0xf]
          %v2477 = vld [vmem:[%s17 + $0x14] sm:$0xf]
          %v2478 = vld [vmem:[%s17 + $0x18] sm:$0xf]
          %v2479 = vld [vmem:[%s17 + $0x1c] sm:$0xf]
          %v2480 = vld [vmem:[%s17 + $0x20] sm:$0xf]
          %v2481 = vld [vmem:[%s17 + $0x24] sm:$0xf]
          %v2482 = vld [vmem:[%s17 + $0x28] sm:$0xf]
          %v2483 = vld [vmem:[%s17 + $0x2c] sm:$0xf]
          %v2484 = vld [vmem:[%s17 + $0x30] sm:$0xf]
          %v2485 = vld [vmem:[%s17 + $0x34] sm:$0xf]
          %v2486 = vld [vmem:[%s17 + $0x38] sm:$0xf]
          %v2487 = vld [vmem:[%s17 + $0x3c] sm:$0xf]
          %v2488 = vld [vmem:[%s18] sm:$0x1]
          %v2490 = vlaneseq
          %v2491 = vshrl.u32 %v2490, 7
          %v2492 = vsub.s32 0, %v2491
          %v2493 = vrot.slane %v2488, %v2492
          %v2511 = vunpack.c.l.b16 %v2472
          %v2512 = vunpack.c.l.b16 %v2473
          %v2513 = vunpack.c.l.b16 %v2474
          %v2514 = vunpack.c.l.b16 %v2475
          %v2515 = vunpack.c.l.b16 %v2476
          %v2516 = vunpack.c.l.b16 %v2477
          %v2517 = vunpack.c.l.b16 %v2478
          %v2518 = vunpack.c.l.b16 %v2479
          %v2519 = vunpack.c.l.b16 %v2480
          %v2520 = vunpack.c.l.b16 %v2481
          %v2521 = vunpack.c.l.b16 %v2482
          %v2522 = vunpack.c.l.b16 %v2483
          %v2523 = vunpack.c.l.b16 %v2484
          %v2524 = vunpack.c.l.b16 %v2485
          %v2525 = vunpack.c.l.b16 %v2486
          %v2526 = vunpack.c.l.b16 %v2487
          %v2527 = vpack.c.b16 %v2512, %v2511
          %v2528 = vpack.c.b16 %v2514, %v2513
          %v2529 = vpack.c.b16 %v2516, %v2515
          %v2530 = vpack.c.b16 %v2518, %v2517
          %v2531 = vpack.c.b16 %v2520, %v2519
          %v2532 = vpack.c.b16 %v2522, %v2521
          %v2533 = vpack.c.b16 %v2524, %v2523
          %v2534 = vpack.c.b16 %v2526, %v2525
          %2543 = vmatprep.subr.bf16.mxu0 0
          %2544 = vmatpush1.bf16.msra.mxu0 %v2527
          %2545 = vmatprep.subr.bf16.mxu0 0
          %2546 = vmatpush1.bf16.msra.mxu0 %v2528
          %2547 = vmatprep.subr.bf16.mxu0 0
          %2548 = vmatpush1.bf16.msra.mxu0 %v2529
          %2549 = vmatprep.subr.bf16.mxu0 0
          %2550 = vmatpush1.bf16.msra.mxu0 %v2530
          %2551 = vmatprep.subr.bf16.mxu0 0
          %2552 = vmatpush1.bf16.msra.mxu0 %v2531
          %2553 = vmatprep.subr.bf16.mxu0 0
          %2554 = vmatpush1.bf16.msra.mxu0 %v2532
          %2555 = vmatprep.subr.bf16.mxu0 0
          %2556 = vmatpush1.bf16.msra.mxu0 %v2533
          %2557 = vmatprep.subr.bf16.mxu0 0
          %2558 = vmatpush1.bf16.msra.mxu0 %v2534
          %2559 = vmatprep.subr.bf16.mxu0 0
          %2560 = vmatpush1.bf16.msra.mxu0 0
          %2561 = vmatprep.subr.bf16.mxu0 0
          %2562 = vmatpush1.bf16.msra.mxu0 0
          %2563 = vmatprep.subr.bf16.mxu0 0
          %2564 = vmatpush1.bf16.msra.mxu0 0
          %2565 = vmatprep.subr.bf16.mxu0 0
          %2566 = vmatpush1.bf16.msra.mxu0 0
          %2567 = vmatprep.subr.bf16.mxu0 0
          %2568 = vmatpush1.bf16.msra.mxu0 0
          %2569 = vmatprep.subr.bf16.mxu0 0
          %2570 = vmatpush1.bf16.msra.mxu0 0
          %2571 = vmatprep.subr.bf16.mxu0 0
          %2572 = vmatpush1.bf16.msra.mxu0 0
          %2573 = vmatprep.subr.bf16.mxu0 0
          %2574 = vmatpush1.bf16.msra.mxu0 0
          %2575 = vmatprep.mubr.bf16.mxu0 0
          %2576 = vmatmul.mubr.bf16.gmra.mrb[0].mxu0 %v2471
          %v2577 = vpop.f32.mrb[0].mxu0
          %v2578 = vadd.f32 %v2493, %v2577
          %v2579 = vpop.f32.mrb[0].mxu0
          %v2580 = vpop.f32.mrb[0].mxu0
          %v2581 = vpop.f32.mrb[0].mxu0
          %2582 = vdwg.mxu0
          %2583 = vst [vmem:[#allocation9] sm:$0x3] %v2578
        $region116: #{disaster_net_forward.1} parent=95 // pred_fallthru
          _
        // Predicated region
        $region117: #{disaster_net_forward.1} parent=95 // pred_check
          %p2584 = pneg %p504
        $region118: #{disaster_net_forward.1} parent=95 // pred_check_branch
          %2586 = sbr.rel (%p2584) target = $region120
        $region119: #{disaster_net_forward.1} parent=95 // pred_region
          %s2588 = ssub.s32 32, 32
          %2589 = vsyncadd [#allocation5], %s2588
          %s2591 = sshll.u32 [#allocation9], 4
          %s2592 = int_to_ptr.vmem [resolvable:$true] %s2591
          %2594 = dma.vmem_to_hbm [thread:$0]  %s2592, 32, %s19, [#allocation5]
        $region120: #{disaster_net_forward.1} parent=95 // pred_fallthru
          _
        // Predicated region
        $region121: #{disaster_net_forward.1} parent=95 // pred_check
          %p2595 = pneg %p504
        $region122: #{disaster_net_forward.1} parent=95 // pred_check_branch
          %2597 = sbr.rel (%p2595) target = $region124
        $region123: #{disaster_net_forward.1} parent=95 // pred_region
          %2598 = dma.done [#allocation5], 32
        $region124: #{disaster_net_forward.1} parent=95 // pred_fallthru
          _
      $region96: #{disaster_net_forward.1} parent=5 // pred_fallthru
        _
      %p2599 = scmp.le.s32.totalorder 2, %s32
      // Predicated region
      $region125: #{disaster_net_forward.1} parent=5 // pred_check
        %p2600 = pneg %p2599
      $region126: #{disaster_net_forward.1} parent=5 // pred_check_branch
        %2602 = sbr.rel (%p2600) target = $region128
      $region127: #{disaster_net_forward.1} parent=5 // pred_region
        %s2603 = ssub.s32 %s32, 2
      $region128: #{disaster_net_forward.1} parent=5 // pred_fallthru
        _
    $region6: #{disaster_net_forward.1} parent=1 // loop_footer
      %s36 = sadd.s32 1, %s32
    $region7: #{disaster_net_forward.1} parent=1 // loop_footer_branch
      %31 = sbr.rel target = $region3
    $region8: #{disaster_net_forward.1} parent=1 // loop_exit
      _
    %2604 = vsyncpa [#allocation4], 1
    %s2605 = scalar_lea.sflag [#allocation4], 1
    %2606 = vsyncpa %s2605, 1
    %2607 = vsyncpa [#allocation7], 1
    %s2608 = scalar_lea.sflag [#allocation7], 1
    %2609 = vsyncpa %s2608, 1
    %2610 = vsyncpa [#allocation5], 1
    %s2611 = scalar_lea.sflag [#allocation5], 1
    %2612 = vsyncpa %s2611, 1

</llo_original>
